<compile_context>
chip_gen: v6e
topology: v6e:2x2x1
jax: 0.10.0
libtpu: 0.0.40
codegen_flags: <defaults>
</compile_context>

<pallas_src>
import jax
import jax.numpy as jnp
from jax.experimental import pallas as pl
from jax.experimental.pallas import tpu as pltpu

_BF16 = jnp.bfloat16
_F32 = jnp.float32


def _round_up(v, m):
    return ((v + m - 1) // m) * m


# --------------------------- Pallas kernel ----------------------------------

def _bigcn_branch_kernel(a_ref, xw1_ref, s_ref, p_ref, r_ref, rb_ref,
                         b1_ref, w2a_ref, b2_ref, y_ref):
    """One TD/BU branch per grid step (grid axis 0 = branch, 'parallel').

    All matmuls run bf16 x bf16 -> f32 accumulation on the MXU.
    """
    a = a_ref[...]        # [N, N]   bf16 normalized adjacency (self loops added)
    xw1 = xw1_ref[...]    # [N, hid] bf16 hoisted x @ W1
    s = s_ref[...]        # [N, B]   bf16 one_hot(batch)
    p = p_ref[...]        # [B, N]   bf16 mean-pool matrix (scatter_mean)
    r = r_ref[...]        # [B, N]   bf16 one_hot(rootindex)
    rb = rb_ref[...]      # [B, out] bf16 hoisted relu(x[rootindex]) @ W2b

    # conv1:  A_hat @ (x @ W1) + b1
    h1 = jnp.dot(a, xw1, preferred_element_type=_F32) + b1_ref[...]          # [N, hid]
    h1r = jnp.maximum(h1, 0.0)

    # conv2 on cat(relu(conv1), relu(root_extend)):
    #   relu(root_extend) @ W2b == S @ rb      (rb precomputed in the wrapper)
    # F.dropout is identity at inference time.
    z = (jnp.dot(h1r.astype(_BF16), w2a_ref[...], preferred_element_type=_F32)
         + jnp.dot(s, rb, preferred_element_type=_F32))                      # [N, out]
    h2 = jnp.dot(a, z.astype(_BF16), preferred_element_type=_F32) + b2_ref[...]
    h2r = jnp.maximum(h2, 0.0)

    # scatter_mean(cat(h2r, root_extend(conv1_out)), batch)
    #   == cat(P @ h2r, conv1_out[rootindex])   (since P @ G == one_hot(root))
    y1 = jnp.dot(p, h2r.astype(_BF16), preferred_element_type=_F32)          # [B, out]
    y2 = jnp.dot(r, h1.astype(_BF16), preferred_element_type=_F32)           # [B, hid]

    # One lane-dense store of the whole [B, pad128(out+hid)] slab.
    slab = jnp.concatenate([y1, y2], axis=1)
    pad = y_ref.shape[1] - slab.shape[1]
    if pad:
        slab = jnp.concatenate(
            [slab, jnp.zeros((slab.shape[0], pad), _F32)], axis=1)
    y_ref[...] = slab


# ------------------------- pallas_call construction --------------------------

def _vmem_capacity_bytes():
    """Physical VMEM per TensorCore; conservative fallback if query fails."""
    try:
        cap = int(pltpu.get_tpu_info().vmem_capacity_bytes)
        if cap > 0:
            return cap
    except Exception:
        pass
    return 64 * 1024 * 1024   # assume the smallest (v7x-like) part if unknown


def _build_branch_call(n, n_graphs, hid, out, out_pad, use_pipeline_hints):
    branch_map = lambda br: (br, 0, 0)   # per-branch tensors
    shared_map = lambda br: (0, 0)       # tensors shared by both branches

    vmem_cap = _vmem_capacity_bytes()
    # Leave DMA/scratch headroom: ~56 MB on 64 MiB/TC (v7x), ~110 MB on the
    # 128 MiB parts (v5e/v6e).
    vmem_limit = min(int(vmem_cap * 0.85), 110 * 1024 * 1024)
    # On 64 MiB/TC parts the 'parallel' branch axis gives each core exactly one
    # iteration, so double-buffering per-branch operands only wastes VMEM.
    # On 128 MiB parts the grid runs sequentially on one core and Buffered(2)
    # overlaps branch 1's adjacency DMA with branch 0's compute.
    branch_bufs = 1 if vmem_cap <= 64 * 1024 * 1024 else 2

    if use_pipeline_hints:
        def bspec(shape):   # per-branch operand
            return pl.BlockSpec(shape, branch_map,
                                pipeline_mode=pl.Buffered(branch_bufs))

        def sspec(shape):   # shared operand: constant index_map -> 1 buffer
            return pl.BlockSpec(shape, shared_map,
                                pipeline_mode=pl.Buffered(1))
    else:
        def bspec(shape):
            return pl.BlockSpec(shape, branch_map)

        def sspec(shape):
            return pl.BlockSpec(shape, shared_map)

    return pl.pallas_call(
        _bigcn_branch_kernel,
        out_shape=jax.ShapeDtypeStruct((2, n_graphs, out_pad), jnp.float32),
        grid=(2,),
        in_specs=[
            bspec((None, n, n)),            # A_hat (bf16, per branch)
            bspec((None, n, hid)),          # xw1 = x @ W1
            sspec((n, n_graphs)),           # S = one_hot(batch)
            sspec((n_graphs, n)),           # P = mean pool
            sspec((n_graphs, n)),           # R = one_hot(rootindex)
            bspec((None, n_graphs, out)),   # rb = relu(x[root]) @ W2b
            bspec((None, 1, hid)),          # b1
            bspec((None, hid, out)),        # W2a
            bspec((None, 1, out)),          # b2
        ],
        out_specs=pl.BlockSpec((None, n_graphs, out_pad), branch_map),
        compiler_params=pltpu.CompilerParams(
            dimension_semantics=("parallel",),   # branches -> dual TC on v7x
            vmem_limit_bytes=vmem_limit,
        ),
    )


def bigcn_branches(a2, xw1_2, s, p, r, rb_2, b1_2, w2a_2, b2_2):
    """Run both (BU, TD) branches in one fused pallas_call.

    a2:     [2, N, N]     bf16 normalized adjacency (branch 0 = BU, 1 = TD)
    xw1_2:  [2, N, hid]   bf16 hoisted x @ W1
    s:      [N, B]        bf16 one_hot(batch)
    p:      [B, N]        bf16 mean-pool matrix
    r:      [B, N]        bf16 one_hot(rootindex)
    rb_2:   [2, B, out]   bf16 hoisted relu(x[rootindex]) @ W2b
    b1_2:   [2, 1, hid]   f32
    w2a_2:  [2, hid, out] bf16
    b2_2:   [2, 1, out]   f32
    returns [2, B, out + hid] f32
    """
    _, n, _ = a2.shape
    n_graphs = p.shape[0]
    hid = xw1_2.shape[2]
    out = w2a_2.shape[2]
    out_pad = _round_up(out + hid, 128)     # lane-dense single store

    args = (a2, xw1_2, s, p, r, rb_2, b1_2, w2a_2, b2_2)
    try:
        y = _build_branch_call(n, n_graphs, hid, out, out_pad, True)(*args)
    except Exception:
        # Older jax without BlockSpec pipeline_mode: drop the buffering hints,
        # keep everything else identical.
        y = _build_branch_call(n, n_graphs, hid, out, out_pad, False)(*args)
    return y[:, :, :out + hid]


# ---------------- plain-JAX glue (graph preprocessing, params) ----------------

def gcn_norm_adj(edge_index, num_nodes):
    """M = D^{-1/2} (A + I) D^{-1/2} with A[dst, src] = 1 (PyG GCNConv norm).

    Note: .at[].set deduplicates repeated edges (fine for tree-shaped rumor
    graphs; PyG would count duplicates).
    """
    src, dst = edge_index[0], edge_index[1]
    adj = jnp.zeros((num_nodes, num_nodes), jnp.float32)
    adj = adj.at[dst, src].set(1.0)
    adj = adj + jnp.eye(num_nodes, dtype=jnp.float32)
    deg = adj.sum(axis=1)
    dinv = jnp.where(deg > 0, 1.0 / jnp.sqrt(deg), 0.0)
    return dinv[:, None] * adj * dinv[None, :]


def mean_pool_matrix(batch, num_graphs):
    """P[b, i] = 1/|graph b| if batch[i] == b  (scatter_mean)."""
    onehot = jax.nn.one_hot(batch, num_graphs, dtype=jnp.float32).T  # [B, N]
    counts = jnp.maximum(onehot.sum(axis=1, keepdims=True), 1.0)
    return onehot / counts


def init_branch_params(key, in_feats, hid_feats, out_feats):
    k1, k2 = jax.random.split(key)
    w1 = jax.random.normal(k1, (in_feats, hid_feats), jnp.float32) * 0.1
    b1 = jnp.zeros((1, hid_feats), jnp.float32)
    w2 = jax.random.normal(k2, (hid_feats + in_feats, out_feats), jnp.float32) * 0.1
    b2 = jnp.zeros((1, out_feats), jnp.float32)
    # split W2 according to cat(conv1_out, root_extend) ordering
    return dict(w1=w1, b1=b1, w2a=w2[:hid_feats], w2b=w2[hid_feats:], b2=b2)


def bigcn_forward(td_params, bu_params, x, td_edge_index, bu_edge_index,
                  batch, rootindex, num_graphs):
    n = x.shape[0]
    s = jax.nn.one_hot(batch, num_graphs, dtype=jnp.float32)       # [N, B]
    p = mean_pool_matrix(batch, num_graphs)                        # [B, N]
    r = jax.nn.one_hot(rootindex, n, dtype=jnp.float32)            # [B, N]
    rx = x[rootindex]                                              # [B, in]

    a_td = gcn_norm_adj(td_edge_index, n)
    a_bu = gcn_norm_adj(bu_edge_index, n)
    # branch 0 = BU, branch 1 = TD  (final output is cat(BU_x, TD_x))
    a2 = jnp.stack([a_bu, a_td]).astype(_BF16)

    def stack(key):
        return jnp.stack([bu_params[key], td_params[key]])

    # Hoisted feature projections: keep the [N, in_feats] block out of the
    # fused kernel / VMEM entirely.  bf16 x bf16, f32 accumulate, stored bf16.
    w1_2 = stack('w1').astype(_BF16)
    w2b_2 = stack('w2b').astype(_BF16)
    xw1_2 = jnp.einsum('ni,bih->bnh', x.astype(_BF16), w1_2,
                       preferred_element_type=_F32).astype(_BF16)    # [2, N, hid]
    rb_2 = jnp.einsum('gi,bio->bgo', jnp.maximum(rx, 0.0).astype(_BF16), w2b_2,
                      preferred_element_type=_F32).astype(_BF16)     # [2, B, out]

    y = bigcn_branches(a2, xw1_2,
                       s.astype(_BF16), p.astype(_BF16), r.astype(_BF16),
                       rb_2,
                       stack('b1'),
                       stack('w2a').astype(_BF16),
                       stack('b2'))
    return jnp.concatenate([y[0], y[1]], axis=1)   # [B, 2*(out + hid)]


# ---------------------------- pure-JAX reference ------------------------------

def _branch_ref(a, x, batch, rootindex, params, num_graphs):
    h1 = a @ (x @ params['w1']) + params['b1']
    re1 = x[rootindex][batch]
    cat1 = jnp.maximum(jnp.concatenate([h1, re1], axis=1), 0.0)
    w2 = jnp.concatenate([params['w2a'], params['w2b']], axis=0)
    h2 = jnp.maximum(a @ (cat1 @ w2) + params['b2'], 0.0)
    re2 = h1[rootindex][batch]
    cat2 = jnp.concatenate([h2, re2], axis=1)
    p = mean_pool_matrix(batch, num_graphs)
    return p @ cat2


def bigcn_reference(td_params, bu_params, x, td_edge_index, bu_edge_index,
                    batch, rootindex, num_graphs):
    n = x.shape[0]
    a_td = gcn_norm_adj(td_edge_index, n)
    a_bu = gcn_norm_adj(bu_edge_index, n)
    bu = _branch_ref(a_bu, x, batch, rootindex, bu_params, num_graphs)
    td = _branch_ref(a_td, x, batch, rootindex, td_params, num_graphs)
    return jnp.concatenate([bu, td], axis=1)


# ------------------------------------ demo ------------------------------------

if __name__ == "__main__":
    in_feats, hid_feats, out_feats = 16, 32, 32
    num_graphs = 2
    nodes_per_graph = 8
    n_nodes = num_graphs * nodes_per_graph

    key = jax.random.PRNGKey(0)
    kx, ktd, kbu = jax.random.split(key, 3)

    # node features
    x = jax.random.normal(kx, (n_nodes, in_feats), jnp.float32)

    # two small propagation trees (parent -> child edges), roots at 0 and 8
    tree = [(0, 1), (0, 2), (1, 3), (1, 4), (2, 5), (2, 6), (3, 7)]
    src, dst = [], []
    for gidx in range(num_graphs):
        off = gidx * nodes_per_graph
        for s_, d_ in tree:
            src.append(s_ + off)
            dst.append(d_ + off)
    td_edge_index = jnp.array([src, dst], dtype=jnp.int32)       # top-down
    bu_edge_index = jnp.array([dst, src], dtype=jnp.int32)       # bottom-up (reversed)

    batch = jnp.repeat(jnp.arange(num_graphs, dtype=jnp.int32), nodes_per_graph)
    rootindex = jnp.array([0, nodes_per_graph], dtype=jnp.int32)

    td_params = init_branch_params(ktd, in_feats, hid_feats, out_feats)
    bu_params = init_branch_params(kbu, in_feats, hid_feats, out_feats)

    out = bigcn_forward(td_params, bu_params, x, td_edge_index, bu_edge_index,
                        batch, rootindex, num_graphs)
    out = jax.block_until_ready(out)

    assert out.shape == (num_graphs, 2 * (out_feats + hid_feats)), out.shape
    assert jnp.all(jnp.isfinite(out))

    ref = bigcn_reference(td_params, bu_params, x, td_edge_index, bu_edge_index,
                          batch, rootindex, num_graphs)
    assert jnp.allclose(out, ref, atol=3e-2, rtol=3e-2), "mismatch vs f32 reference"

    print("KERNEL_OK")
</pallas_src>

<mosaic_0001>
module attributes {stable_mosaic.version = 11 : i64} {
  func.func @_bigcn_branch_kernel(%arg0: i32, %arg1: memref<1x16x16xbf16, #tpu.memory_space<vmem>>, %arg2: memref<1x16x32xbf16, #tpu.memory_space<vmem>>, %arg3: memref<16x2xbf16, #tpu.memory_space<vmem>>, %arg4: memref<2x16xbf16, #tpu.memory_space<vmem>>, %arg5: memref<2x16xbf16, #tpu.memory_space<vmem>>, %arg6: memref<1x2x32xbf16, #tpu.memory_space<vmem>>, %arg7: memref<1x1x32xf32, #tpu.memory_space<vmem>>, %arg8: memref<1x32x32xbf16, #tpu.memory_space<vmem>>, %arg9: memref<1x1x32xf32, #tpu.memory_space<vmem>>, %arg10: memref<1x2x128xf32, #tpu.memory_space<vmem>>) attributes {dimension_semantics = [#tpu.dimension_semantics<parallel>], iteration_bounds = array<i64: 2>, scalar_prefetch = 0 : i64, scratch_operands = 0 : i64, tpu.core_type = #tpu.core_type<tc>, window_params = [{pipeline_mode = #tpu.pipeline_mode<synchronous>, transform_indices = @transform_0, window_bounds = array<i64: 1, 16, 16>}, {pipeline_mode = #tpu.pipeline_mode<synchronous>, transform_indices = @transform_1, window_bounds = array<i64: 1, 16, 32>}, {pipeline_mode = #tpu.pipeline_mode<synchronous>, transform_indices = @transform_2, window_bounds = array<i64: 16, 2>}, {pipeline_mode = #tpu.pipeline_mode<synchronous>, transform_indices = @transform_3, window_bounds = array<i64: 2, 16>}, {pipeline_mode = #tpu.pipeline_mode<synchronous>, transform_indices = @transform_4, window_bounds = array<i64: 2, 16>}, {pipeline_mode = #tpu.pipeline_mode<synchronous>, transform_indices = @transform_5, window_bounds = array<i64: 1, 2, 32>}, {pipeline_mode = #tpu.pipeline_mode<synchronous>, transform_indices = @transform_6, window_bounds = array<i64: 1, 1, 32>}, {pipeline_mode = #tpu.pipeline_mode<synchronous>, transform_indices = @transform_7, window_bounds = array<i64: 1, 32, 32>}, {pipeline_mode = #tpu.pipeline_mode<synchronous>, transform_indices = @transform_8, window_bounds = array<i64: 1, 1, 32>}, {transform_indices = @transform_9, window_bounds = array<i64: 1, 2, 128>}]} {
    %c0 = arith.constant 0 : index
    %c0_0 = arith.constant 0 : index
    %c0_1 = arith.constant 0 : index
    %0 = vector.load %arg1[%c0, %c0_0, %c0_1] : memref<1x16x16xbf16, #tpu.memory_space<vmem>>, vector<1x16x16xbf16>
    %1 = vector.shape_cast %0 : vector<1x16x16xbf16> to vector<16x16xbf16>
    %c0_2 = arith.constant 0 : index
    %c0_3 = arith.constant 0 : index
    %c0_4 = arith.constant 0 : index
    %2 = vector.load %arg2[%c0_2, %c0_3, %c0_4] : memref<1x16x32xbf16, #tpu.memory_space<vmem>>, vector<1x16x32xbf16>
    %3 = vector.shape_cast %2 : vector<1x16x32xbf16> to vector<16x32xbf16>
    %c0_5 = arith.constant 0 : index
    %c0_6 = arith.constant 0 : index
    %4 = vector.load %arg3[%c0_5, %c0_6] : memref<16x2xbf16, #tpu.memory_space<vmem>>, vector<16x2xbf16>
    %c0_7 = arith.constant 0 : index
    %c0_8 = arith.constant 0 : index
    %5 = vector.load %arg4[%c0_7, %c0_8] : memref<2x16xbf16, #tpu.memory_space<vmem>>, vector<2x16xbf16>
    %c0_9 = arith.constant 0 : index
    %c0_10 = arith.constant 0 : index
    %6 = vector.load %arg5[%c0_9, %c0_10] : memref<2x16xbf16, #tpu.memory_space<vmem>>, vector<2x16xbf16>
    %c0_11 = arith.constant 0 : index
    %c0_12 = arith.constant 0 : index
    %c0_13 = arith.constant 0 : index
    %7 = vector.load %arg6[%c0_11, %c0_12, %c0_13] : memref<1x2x32xbf16, #tpu.memory_space<vmem>>, vector<1x2x32xbf16>
    %8 = vector.shape_cast %7 : vector<1x2x32xbf16> to vector<2x32xbf16>
    %cst = arith.constant dense<0.000000e+00> : vector<16x32xf32>
    %9 = tpu.matmul %1, %3, %cst {dimension_numbers = #tpu.dot_dimension_numbers<[1], [0], [0], [1], [0, 0, 1, 1], [], []>} : vector<16x16xbf16>, vector<16x32xbf16>, vector<16x32xf32> -> vector<16x32xf32>
    %c0_14 = arith.constant 0 : index
    %c0_15 = arith.constant 0 : index
    %c0_16 = arith.constant 0 : index
    %10 = vector.load %arg7[%c0_14, %c0_15, %c0_16] : memref<1x1x32xf32, #tpu.memory_space<vmem>>, vector<1x1x32xf32>
    %11 = vector.shape_cast %10 : vector<1x1x32xf32> to vector<1x32xf32>
    %12 = vector.broadcast %11 : vector<1x32xf32> to vector<16x32xf32>
    %13 = arith.addf %9, %12 : vector<16x32xf32>
    %cst_17 = arith.constant 0.000000e+00 : f32
    %14 = vector.broadcast %cst_17 : f32 to vector<16x32xf32>
    %15 = arith.maximumf %13, %14 : vector<16x32xf32>
    %16 = arith.truncf %15 : vector<16x32xf32> to vector<16x32xbf16>
    %c0_18 = arith.constant 0 : index
    %c0_19 = arith.constant 0 : index
    %c0_20 = arith.constant 0 : index
    %17 = vector.load %arg8[%c0_18, %c0_19, %c0_20] : memref<1x32x32xbf16, #tpu.memory_space<vmem>>, vector<1x32x32xbf16>
    %18 = vector.shape_cast %17 : vector<1x32x32xbf16> to vector<32x32xbf16>
    %cst_21 = arith.constant dense<0.000000e+00> : vector<16x32xf32>
    %19 = tpu.matmul %16, %18, %cst_21 {dimension_numbers = #tpu.dot_dimension_numbers<[1], [0], [0], [1], [0, 0, 1, 1], [], []>} : vector<16x32xbf16>, vector<32x32xbf16>, vector<16x32xf32> -> vector<16x32xf32>
    %cst_22 = arith.constant dense<0.000000e+00> : vector<16x32xf32>
    %20 = tpu.matmul %4, %8, %cst_22 {dimension_numbers = #tpu.dot_dimension_numbers<[1], [0], [0], [1], [0, 0, 1, 1], [], []>} : vector<16x2xbf16>, vector<2x32xbf16>, vector<16x32xf32> -> vector<16x32xf32>
    %21 = arith.addf %19, %20 : vector<16x32xf32>
    %22 = arith.truncf %21 : vector<16x32xf32> to vector<16x32xbf16>
    %cst_23 = arith.constant dense<0.000000e+00> : vector<16x32xf32>
    %23 = tpu.matmul %1, %22, %cst_23 {dimension_numbers = #tpu.dot_dimension_numbers<[1], [0], [0], [1], [0, 0, 1, 1], [], []>} : vector<16x16xbf16>, vector<16x32xbf16>, vector<16x32xf32> -> vector<16x32xf32>
    %c0_24 = arith.constant 0 : index
    %c0_25 = arith.constant 0 : index
    %c0_26 = arith.constant 0 : index
    %24 = vector.load %arg9[%c0_24, %c0_25, %c0_26] : memref<1x1x32xf32, #tpu.memory_space<vmem>>, vector<1x1x32xf32>
    %25 = vector.shape_cast %24 : vector<1x1x32xf32> to vector<1x32xf32>
    %26 = vector.broadcast %25 : vector<1x32xf32> to vector<16x32xf32>
    %27 = arith.addf %23, %26 : vector<16x32xf32>
    %cst_27 = arith.constant 0.000000e+00 : f32
    %28 = vector.broadcast %cst_27 : f32 to vector<16x32xf32>
    %29 = arith.maximumf %27, %28 : vector<16x32xf32>
    %30 = arith.truncf %29 : vector<16x32xf32> to vector<16x32xbf16>
    %cst_28 = arith.constant dense<0.000000e+00> : vector<2x32xf32>
    %31 = tpu.matmul %5, %30, %cst_28 {dimension_numbers = #tpu.dot_dimension_numbers<[1], [0], [0], [1], [0, 0, 1, 1], [], []>} : vector<2x16xbf16>, vector<16x32xbf16>, vector<2x32xf32> -> vector<2x32xf32>
    %32 = arith.truncf %13 : vector<16x32xf32> to vector<16x32xbf16>
    %cst_29 = arith.constant dense<0.000000e+00> : vector<2x32xf32>
    %33 = tpu.matmul %6, %32, %cst_29 {dimension_numbers = #tpu.dot_dimension_numbers<[1], [0], [0], [1], [0, 0, 1, 1], [], []>} : vector<2x16xbf16>, vector<16x32xbf16>, vector<2x32xf32> -> vector<2x32xf32>
    %34 = tpu.concatenate %31, %33 in 1 : vector<2x32xf32>, vector<2x32xf32> -> vector<2x64xf32>
    %cst_30 = arith.constant 0.000000e+00 : f32
    %35 = vector.broadcast %cst_30 : f32 to vector<2x64xf32>
    %36 = tpu.concatenate %34, %35 in 1 : vector<2x64xf32>, vector<2x64xf32> -> vector<2x128xf32>
    %c0_31 = arith.constant 0 : index
    %c0_32 = arith.constant 0 : index
    %c0_33 = arith.constant 0 : index
    %37 = vector.load %arg10[%c0_31, %c0_32, %c0_33] : memref<1x2x128xf32, #tpu.memory_space<vmem>>, vector<1x2x128xf32>
    %38 = vector.shape_cast %37 : vector<1x2x128xf32> to vector<2x128xf32>
    %39 = vector.shape_cast %36 : vector<2x128xf32> to vector<1x2x128xf32>
    tpu.vector_store %arg10[%c0_31, %c0_32, %c0_33], %39 {strides = array<i32>} : memref<1x2x128xf32, #tpu.memory_space<vmem>>, vector<1x2x128xf32>,
    return
  }
  func.func @transform_0(%arg0: i32) -> (i32, i32, i32) {
    %c0_i32 = arith.constant 0 : i32
    %c0_i32_0 = arith.constant 0 : i32
    %c0_i32_1 = arith.constant 0 : i32
    return %arg0, %c0_i32, %c0_i32_0 : i32, i32, i32
  }
  func.func @transform_1(%arg0: i32) -> (i32, i32, i32) {
    %c0_i32 = arith.constant 0 : i32
    %c0_i32_0 = arith.constant 0 : i32
    %c0_i32_1 = arith.constant 0 : i32
    return %arg0, %c0_i32, %c0_i32_0 : i32, i32, i32
  }
  func.func @transform_2(%arg0: i32) -> (i32, i32) {
    %c0_i32 = arith.constant 0 : i32
    %c0_i32_0 = arith.constant 0 : i32
    %c0_i32_1 = arith.constant 0 : i32
    return %c0_i32, %c0_i32_0 : i32, i32
  }
  func.func @transform_3(%arg0: i32) -> (i32, i32) {
    %c0_i32 = arith.constant 0 : i32
    %c0_i32_0 = arith.constant 0 : i32
    %c0_i32_1 = arith.constant 0 : i32
    return %c0_i32, %c0_i32_0 : i32, i32
  }
  func.func @transform_4(%arg0: i32) -> (i32, i32) {
    %c0_i32 = arith.constant 0 : i32
    %c0_i32_0 = arith.constant 0 : i32
    %c0_i32_1 = arith.constant 0 : i32
    return %c0_i32, %c0_i32_0 : i32, i32
  }
  func.func @transform_5(%arg0: i32) -> (i32, i32, i32) {
    %c0_i32 = arith.constant 0 : i32
    %c0_i32_0 = arith.constant 0 : i32
    %c0_i32_1 = arith.constant 0 : i32
    return %arg0, %c0_i32, %c0_i32_0 : i32, i32, i32
  }
  func.func @transform_6(%arg0: i32) -> (i32, i32, i32) {
    %c0_i32 = arith.constant 0 : i32
    %c0_i32_0 = arith.constant 0 : i32
    %c0_i32_1 = arith.constant 0 : i32
    return %arg0, %c0_i32, %c0_i32_0 : i32, i32, i32
  }
  func.func @transform_7(%arg0: i32) -> (i32, i32, i32) {
    %c0_i32 = arith.constant 0 : i32
    %c0_i32_0 = arith.constant 0 : i32
    %c0_i32_1 = arith.constant 0 : i32
    return %arg0, %c0_i32, %c0_i32_0 : i32, i32, i32
  }
  func.func @transform_8(%arg0: i32) -> (i32, i32, i32) {
    %c0_i32 = arith.constant 0 : i32
    %c0_i32_0 = arith.constant 0 : i32
    %c0_i32_1 = arith.constant 0 : i32
    return %arg0, %c0_i32, %c0_i32_0 : i32, i32, i32
  }
  func.func @transform_9(%arg0: i32) -> (i32, i32, i32) {
    %c0_i32 = arith.constant 0 : i32
    %c0_i32_0 = arith.constant 0 : i32
    %c0_i32_1 = arith.constant 0 : i32
    return %arg0, %c0_i32, %c0_i32_0 : i32, i32, i32
  }
}

module attributes {stable_mosaic.version = 11 : i64} {
  func.func @_bigcn_branch_kernel(%arg0: i32, %arg1: memref<1x16x16xbf16, #tpu.memory_space<vmem>>, %arg2: memref<1x16x32xbf16, #tpu.memory_space<vmem>>, %arg3: memref<16x2xbf16, #tpu.memory_space<vmem>>, %arg4: memref<2x16xbf16, #tpu.memory_space<vmem>>, %arg5: memref<2x16xbf16, #tpu.memory_space<vmem>>, %arg6: memref<1x2x32xbf16, #tpu.memory_space<vmem>>, %arg7: memref<1x1x32xf32, #tpu.memory_space<vmem>>, %arg8: memref<1x32x32xbf16, #tpu.memory_space<vmem>>, %arg9: memref<1x1x32xf32, #tpu.memory_space<vmem>>, %arg10: memref<1x2x128xf32, #tpu.memory_space<vmem>>) attributes {dimension_semantics = [#tpu.dimension_semantics<parallel>], iteration_bounds = array<i64: 2>, scalar_prefetch = 0 : i64, scratch_operands = 0 : i64, tpu.core_type = #tpu.core_type<tc>, window_params = [{transform_indices = @transform_0, window_bounds = array<i64: 1, 16, 16>}, {transform_indices = @transform_1, window_bounds = array<i64: 1, 16, 32>}, {pipeline_mode = #tpu.pipeline_mode<synchronous>, transform_indices = @transform_2, window_bounds = array<i64: 16, 2>}, {pipeline_mode = #tpu.pipeline_mode<synchronous>, transform_indices = @transform_3, window_bounds = array<i64: 2, 16>}, {pipeline_mode = #tpu.pipeline_mode<synchronous>, transform_indices = @transform_4, window_bounds = array<i64: 2, 16>}, {transform_indices = @transform_5, window_bounds = array<i64: 1, 2, 32>}, {transform_indices = @transform_6, window_bounds = array<i64: 1, 1, 32>}, {transform_indices = @transform_7, window_bounds = array<i64: 1, 32, 32>}, {transform_indices = @transform_8, window_bounds = array<i64: 1, 1, 32>}, {transform_indices = @transform_9, window_bounds = array<i64: 1, 2, 128>}]} {
    %c0 = arith.constant 0 : index
    %c0_0 = arith.constant 0 : index
    %c0_1 = arith.constant 0 : index
    %0 = vector.load %arg1[%c0, %c0_0, %c0_1] : memref<1x16x16xbf16, #tpu.memory_space<vmem>>, vector<1x16x16xbf16>
    %1 = vector.shape_cast %0 : vector<1x16x16xbf16> to vector<16x16xbf16>
    %c0_2 = arith.constant 0 : index
    %c0_3 = arith.constant 0 : index
    %c0_4 = arith.constant 0 : index
    %2 = vector.load %arg2[%c0_2, %c0_3, %c0_4] : memref<1x16x32xbf16, #tpu.memory_space<vmem>>, vector<1x16x32xbf16>
    %3 = vector.shape_cast %2 : vector<1x16x32xbf16> to vector<16x32xbf16>
    %c0_5 = arith.constant 0 : index
    %c0_6 = arith.constant 0 : index
    %4 = vector.load %arg3[%c0_5, %c0_6] : memref<16x2xbf16, #tpu.memory_space<vmem>>, vector<16x2xbf16>
    %c0_7 = arith.constant 0 : index
    %c0_8 = arith.constant 0 : index
    %5 = vector.load %arg4[%c0_7, %c0_8] : memref<2x16xbf16, #tpu.memory_space<vmem>>, vector<2x16xbf16>
    %c0_9 = arith.constant 0 : index
    %c0_10 = arith.constant 0 : index
    %6 = vector.load %arg5[%c0_9, %c0_10] : memref<2x16xbf16, #tpu.memory_space<vmem>>, vector<2x16xbf16>
    %c0_11 = arith.constant 0 : index
    %c0_12 = arith.constant 0 : index
    %c0_13 = arith.constant 0 : index
    %7 = vector.load %arg6[%c0_11, %c0_12, %c0_13] : memref<1x2x32xbf16, #tpu.memory_space<vmem>>, vector<1x2x32xbf16>
    %8 = vector.shape_cast %7 : vector<1x2x32xbf16> to vector<2x32xbf16>
    %cst = arith.constant dense<0.000000e+00> : vector<16x32xf32>
    %9 = tpu.matmul %1, %3, %cst {dimension_numbers = #tpu.dot_dimension_numbers<[1], [0], [0], [1], [0, 0, 1, 1], [], []>} : vector<16x16xbf16>, vector<16x32xbf16>, vector<16x32xf32> -> vector<16x32xf32>
    %c0_14 = arith.constant 0 : index
    %c0_15 = arith.constant 0 : index
    %c0_16 = arith.constant 0 : index
    %10 = vector.load %arg7[%c0_14, %c0_15, %c0_16] : memref<1x1x32xf32, #tpu.memory_space<vmem>>, vector<1x1x32xf32>
    %11 = vector.shape_cast %10 : vector<1x1x32xf32> to vector<1x32xf32>
    %12 = vector.broadcast %11 : vector<1x32xf32> to vector<16x32xf32>
    %13 = arith.addf %9, %12 : vector<16x32xf32>
    %cst_17 = arith.constant 0.000000e+00 : f32
    %14 = vector.broadcast %cst_17 : f32 to vector<16x32xf32>
    %15 = arith.maximumf %13, %14 : vector<16x32xf32>
    %16 = arith.truncf %15 : vector<16x32xf32> to vector<16x32xbf16>
    %c0_18 = arith.constant 0 : index
    %c0_19 = arith.constant 0 : index
    %c0_20 = arith.constant 0 : index
    %17 = vector.load %arg8[%c0_18, %c0_19, %c0_20] : memref<1x32x32xbf16, #tpu.memory_space<vmem>>, vector<1x32x32xbf16>
    %18 = vector.shape_cast %17 : vector<1x32x32xbf16> to vector<32x32xbf16>
    %cst_21 = arith.constant dense<0.000000e+00> : vector<16x32xf32>
    %19 = tpu.matmul %16, %18, %cst_21 {dimension_numbers = #tpu.dot_dimension_numbers<[1], [0], [0], [1], [0, 0, 1, 1], [], []>} : vector<16x32xbf16>, vector<32x32xbf16>, vector<16x32xf32> -> vector<16x32xf32>
    %cst_22 = arith.constant dense<0.000000e+00> : vector<16x32xf32>
    %20 = tpu.matmul %4, %8, %cst_22 {dimension_numbers = #tpu.dot_dimension_numbers<[1], [0], [0], [1], [0, 0, 1, 1], [], []>} : vector<16x2xbf16>, vector<2x32xbf16>, vector<16x32xf32> -> vector<16x32xf32>
    %21 = arith.addf %19, %20 : vector<16x32xf32>
    %22 = arith.truncf %21 : vector<16x32xf32> to vector<16x32xbf16>
    %cst_23 = arith.constant dense<0.000000e+00> : vector<16x32xf32>
    %23 = tpu.matmul %1, %22, %cst_23 {dimension_numbers = #tpu.dot_dimension_numbers<[1], [0], [0], [1], [0, 0, 1, 1], [], []>} : vector<16x16xbf16>, vector<16x32xbf16>, vector<16x32xf32> -> vector<16x32xf32>
    %c0_24 = arith.constant 0 : index
    %c0_25 = arith.constant 0 : index
    %c0_26 = arith.constant 0 : index
    %24 = vector.load %arg9[%c0_24, %c0_25, %c0_26] : memref<1x1x32xf32, #tpu.memory_space<vmem>>, vector<1x1x32xf32>
    %25 = vector.shape_cast %24 : vector<1x1x32xf32> to vector<1x32xf32>
    %26 = vector.broadcast %25 : vector<1x32xf32> to vector<16x32xf32>
    %27 = arith.addf %23, %26 : vector<16x32xf32>
    %cst_27 = arith.constant 0.000000e+00 : f32
    %28 = vector.broadcast %cst_27 : f32 to vector<16x32xf32>
    %29 = arith.maximumf %27, %28 : vector<16x32xf32>
    %30 = arith.truncf %29 : vector<16x32xf32> to vector<16x32xbf16>
    %cst_28 = arith.constant dense<0.000000e+00> : vector<2x32xf32>
    %31 = tpu.matmul %5, %30, %cst_28 {dimension_numbers = #tpu.dot_dimension_numbers<[1], [0], [0], [1], [0, 0, 1, 1], [], []>} : vector<2x16xbf16>, vector<16x32xbf16>, vector<2x32xf32> -> vector<2x32xf32>
    %32 = arith.truncf %13 : vector<16x32xf32> to vector<16x32xbf16>
    %cst_29 = arith.constant dense<0.000000e+00> : vector<2x32xf32>
    %33 = tpu.matmul %6, %32, %cst_29 {dimension_numbers = #tpu.dot_dimension_numbers<[1], [0], [0], [1], [0, 0, 1, 1], [], []>} : vector<2x16xbf16>, vector<16x32xbf16>, vector<2x32xf32> -> vector<2x32xf32>
    %34 = tpu.concatenate %31, %33 in 1 : vector<2x32xf32>, vector<2x32xf32> -> vector<2x64xf32>
    %cst_30 = arith.constant 0.000000e+00 : f32
    %35 = vector.broadcast %cst_30 : f32 to vector<2x64xf32>
    %36 = tpu.concatenate %34, %35 in 1 : vector<2x64xf32>, vector<2x64xf32> -> vector<2x128xf32>
    %c0_31 = arith.constant 0 : index
    %c0_32 = arith.constant 0 : index
    %c0_33 = arith.constant 0 : index
    %37 = vector.load %arg10[%c0_31, %c0_32, %c0_33] : memref<1x2x128xf32, #tpu.memory_space<vmem>>, vector<1x2x128xf32>
    %38 = vector.shape_cast %37 : vector<1x2x128xf32> to vector<2x128xf32>
    %39 = vector.shape_cast %36 : vector<2x128xf32> to vector<1x2x128xf32>
    tpu.vector_store %arg10[%c0_31, %c0_32, %c0_33], %39 {strides = array<i32>} : memref<1x2x128xf32, #tpu.memory_space<vmem>>, vector<1x2x128xf32>,
    return
  }
  func.func @transform_0(%arg0: i32) -> (i32, i32, i32) {
    %c0_i32 = arith.constant 0 : i32
    %c0_i32_0 = arith.constant 0 : i32
    %c0_i32_1 = arith.constant 0 : i32
    return %arg0, %c0_i32, %c0_i32_0 : i32, i32, i32
  }
  func.func @transform_1(%arg0: i32) -> (i32, i32, i32) {
    %c0_i32 = arith.constant 0 : i32
    %c0_i32_0 = arith.constant 0 : i32
    %c0_i32_1 = arith.constant 0 : i32
    return %arg0, %c0_i32, %c0_i32_0 : i32, i32, i32
  }
  func.func @transform_2(%arg0: i32) -> (i32, i32) {
    %c0_i32 = arith.constant 0 : i32
    %c0_i32_0 = arith.constant 0 : i32
    %c0_i32_1 = arith.constant 0 : i32
    return %c0_i32, %c0_i32_0 : i32, i32
  }
  func.func @transform_3(%arg0: i32) -> (i32, i32) {
    %c0_i32 = arith.constant 0 : i32
    %c0_i32_0 = arith.constant 0 : i32
    %c0_i32_1 = arith.constant 0 : i32
    return %c0_i32, %c0_i32_0 : i32, i32
  }
  func.func @transform_4(%arg0: i32) -> (i32, i32) {
    %c0_i32 = arith.constant 0 : i32
    %c0_i32_0 = arith.constant 0 : i32
    %c0_i32_1 = arith.constant 0 : i32
    return %c0_i32, %c0_i32_0 : i32, i32
  }
  func.func @transform_5(%arg0: i32) -> (i32, i32, i32) {
    %c0_i32 = arith.constant 0 : i32
    %c0_i32_0 = arith.constant 0 : i32
    %c0_i32_1 = arith.constant 0 : i32
    return %arg0, %c0_i32, %c0_i32_0 : i32, i32, i32
  }
  func.func @transform_6(%arg0: i32) -> (i32, i32, i32) {
    %c0_i32 = arith.constant 0 : i32
    %c0_i32_0 = arith.constant 0 : i32
    %c0_i32_1 = arith.constant 0 : i32
    return %arg0, %c0_i32, %c0_i32_0 : i32, i32, i32
  }
  func.func @transform_7(%arg0: i32) -> (i32, i32, i32) {
    %c0_i32 = arith.constant 0 : i32
    %c0_i32_0 = arith.constant 0 : i32
    %c0_i32_1 = arith.constant 0 : i32
    return %arg0, %c0_i32, %c0_i32_0 : i32, i32, i32
  }
  func.func @transform_8(%arg0: i32) -> (i32, i32, i32) {
    %c0_i32 = arith.constant 0 : i32
    %c0_i32_0 = arith.constant 0 : i32
    %c0_i32_1 = arith.constant 0 : i32
    return %arg0, %c0_i32, %c0_i32_0 : i32, i32, i32
  }
  func.func @transform_9(%arg0: i32) -> (i32, i32, i32) {
    %c0_i32 = arith.constant 0 : i32
    %c0_i32_0 = arith.constant 0 : i32
    %c0_i32_1 = arith.constant 0 : i32
    return %arg0, %c0_i32, %c0_i32_0 : i32, i32, i32
  }
}

</mosaic_0001>

<llo_original>
// kernel: tpu_custom_call.1
$region0: #{tpu_custom_call.1}
  #allocation0 [shape = 'u32[]', space=smem, size = 0x4, offset = 0x4, fixed_abs, tag = 'smem constant byte address 0x4 - core index']
  #allocation1 [shape = 'u32[144,128]{1,0:T(1,128)}', space=vmem, size = 0x12000, scoped, tag = 'internal scratch']
  %s0 = inlined_call_operand.hbm [shape: bf16[2,16,16], index: 0, kind: input, shape index: {}]
  %s1 = inlined_call_operand.hbm [shape: bf16[2,16,32], index: 1, kind: input, shape index: {}]
  %s2 = inlined_call_operand.vmem [shape: bf16[16,2], index: 2, kind: input, shape index: {}]
  %s3 = inlined_call_operand.vmem [shape: bf16[2,16], index: 3, kind: input, shape index: {}]
  %s4 = inlined_call_operand.vmem [shape: bf16[2,16], index: 4, kind: input, shape index: {}]
  %s5 = inlined_call_operand.vmem [shape: bf16[2,2,32], index: 5, kind: input, shape index: {}]
  %s6 = inlined_call_operand.vmem [shape: f32[2,1,32], index: 6, kind: input, shape index: {}]
  %s7 = inlined_call_operand.hbm [shape: bf16[2,32,32], index: 7, kind: input, shape index: {}]
  %s8 = inlined_call_operand.vmem [shape: f32[2,1,32], index: 8, kind: input, shape index: {}]
  %s9 = inlined_call_operand.hbm [shape: f32[2,2,128], index: 9, kind: output, shape index: {}]
  %s10 = sld [smem:[#allocation0]]
  $region81: #{tpu_custom_call.1} parent=0
    _
  %s12 = ssub.s32 1, %s10
  %s13 = scalar_select 0, %s12, %s10
  $region1: #{tpu_custom_call.1} parent=0
    #allocation2 [shape = 'u8[4096]{0}', space=vmem, size = 0x1000, scoped, tag = 'input window, operand 0, single buffered']
    #allocation3 [shape = 's32[2]{0}', space=sflag, size = 0x8, scoped, tag = 'scoped memory for tpu_custom_call.1']
    #allocation4 [shape = 's32[2]{0}', space=sflag, size = 0x8, scoped, tag = 'scoped memory for tpu_custom_call.1']
    #allocation5 [shape = 'u8[4096]{0}', space=vmem, size = 0x1000, scoped, tag = 'input window, operand 1, single buffered']
    #allocation6 [shape = 's32[1]{0}', space=sflag, size = 0x4, scoped, tag = 'scoped memory for tpu_custom_call.1']
    #allocation7 [shape = 'u8[8192]{0}', space=vmem, size = 0x2000, scoped, tag = 'input window, operand 7, single buffered']
    #allocation8 [shape = 'u8[2048]{0}', space=vmem, size = 0x800, scoped, tag = 'output window, operand 0']
    %14 = vsyncpa [#allocation3], 0
    %15 = vsyncpa [#allocation6], 0
    %16 = vsyncpa [#allocation4], 0
    %s17 = scalar_lea.sflag [#allocation4], 1
    %18 = vsyncpa %s17, 0
    loop: start=0, step=1, limit=4
    $region2: #{tpu_custom_call.1} parent=1 // loop_pre_header
      _
    $region3: #{tpu_custom_call.1} parent=1 // loop_header
      %s20 = sphi 0, %s24
      %p21 = scmp.ge.s32.totalorder %s20, 4
      %s30 = sphi 0, %s32
      %s33 = sphi 0, %s30
      %s34 = sphi 0, %s33
      %s50 = sphi 0, %s34
      %s56 = sphi 0, %s58
      %s59 = sphi 0, %s56
      %s60 = sphi 0, %s59
      %s76 = sphi 0, %s60
      %s80 = sphi 0, %s80
      %s82 = sphi 0, %s80
      %s83 = sphi 0, %s82
      %s97 = sphi 0, %s83
      %s101 = sphi 0, %s101
      %s103 = sphi 0, %s101
      %s104 = sphi 0, %s103
      %s118 = sphi 0, %s104
      %s122 = sphi 0, %s122
      %s124 = sphi 0, %s122
      %s125 = sphi 0, %s124
      %s139 = sphi 0, %s125
      %s145 = sphi 0, %s147
      %s148 = sphi 0, %s145
      %s149 = sphi 0, %s148
      %s165 = sphi 0, %s149
      %s171 = sphi 0, %s173
      %s174 = sphi 0, %s171
      %s175 = sphi 0, %s174
      %s191 = sphi 0, %s175
      %s197 = sphi 0, %s199
      %s200 = sphi 0, %s197
      %s201 = sphi 0, %s200
      %s217 = sphi 0, %s201
      %s223 = sphi 0, %s225
      %s226 = sphi 0, %s223
      %s227 = sphi 0, %s226
      %s243 = sphi 0, %s227
      %s249 = sphi 0, %s251
      %s252 = sphi 0, %s249
      %s253 = sphi 0, %s252
      %s269 = sphi 0, %s253
    $region4: #{tpu_custom_call.1} parent=1 // loop_header_branch
      %23 = sbr.rel (%p21) target = $region8
    $region5: #{tpu_custom_call.1} parent=1 // loop_body
      %s25 = ssub.s32 %s20, 1
      %s26 = ssub.s32 %s20, 2
      %s27 = sadd.s32 %s20, 1
      %s28 = ssub.s32 %s20, %s27
      %p29 = scmp.eq.s32.totalorder %s28, 0
      %s31 = sadd.s32 %s30, 1
      %s32 = scalar_select %p29, %s30, %s31
      %p35 = pneg %p29
      %p36 = scmp.eq.s32.totalorder %s20, 1
      %p37 = por %p35, %p36
      %p38 = scmp.ne.s32.totalorder %s30, %s33
      %p39 = scmp.eq.s32.totalorder %s20, 0
      %p40 = por %p38, %p39
      %p41 = scmp.ne.s32.totalorder %s30, %s33
      %p42 = scmp.eq.s32.totalorder %s25, 1
      %p43 = por %p41, %p42
      %p44 = scmp.ne.s32.totalorder %s33, %s34
      %p45 = scmp.eq.s32.totalorder %s25, 0
      %p46 = por %p44, %p45
      %p47 = scmp.ne.s32.totalorder %s33, %s34
      %p48 = scmp.eq.s32.totalorder %s26, 1
      %p49 = por %p47, %p48
      %p51 = scmp.ne.s32.totalorder %s34, %s50
      %p52 = scmp.eq.s32.totalorder %s26, 0
      %p53 = por %p51, %p52
      %s54 = ssub.s32 %s20, %s27
      %p55 = scmp.eq.s32.totalorder %s54, 0
      %s57 = sadd.s32 %s56, 1
      %s58 = scalar_select %p55, %s56, %s57
      %p61 = pneg %p55
      %p62 = scmp.eq.s32.totalorder %s20, 1
      %p63 = por %p61, %p62
      %p64 = scmp.ne.s32.totalorder %s56, %s59
      %p65 = scmp.eq.s32.totalorder %s20, 0
      %p66 = por %p64, %p65
      %p67 = scmp.ne.s32.totalorder %s56, %s59
      %p68 = scmp.eq.s32.totalorder %s25, 1
      %p69 = por %p67, %p68
      %p70 = scmp.ne.s32.totalorder %s59, %s60
      %p71 = scmp.eq.s32.totalorder %s25, 0
      %p72 = por %p70, %p71
      %p73 = scmp.ne.s32.totalorder %s59, %s60
      %p74 = scmp.eq.s32.totalorder %s26, 1
      %p75 = por %p73, %p74
      %p77 = scmp.ne.s32.totalorder %s60, %s76
      %p78 = scmp.eq.s32.totalorder %s26, 0
      %p79 = por %p77, %p78
      %s81 = sadd.s32 %s80, 1
      %p84 = scmp.eq.s32.totalorder %s20, 1
      %p85 = scmp.ne.s32.totalorder %s80, %s82
      %p86 = scmp.eq.s32.totalorder %s20, 0
      %p87 = por %p85, %p86
      %p88 = scmp.ne.s32.totalorder %s80, %s82
      %p89 = scmp.eq.s32.totalorder %s25, 1
      %p90 = por %p88, %p89
      %p91 = scmp.ne.s32.totalorder %s82, %s83
      %p92 = scmp.eq.s32.totalorder %s25, 0
      %p93 = por %p91, %p92
      %p94 = scmp.ne.s32.totalorder %s82, %s83
      %p95 = scmp.eq.s32.totalorder %s26, 1
      %p96 = por %p94, %p95
      %p98 = scmp.ne.s32.totalorder %s83, %s97
      %p99 = scmp.eq.s32.totalorder %s26, 0
      %p100 = por %p98, %p99
      %s102 = sadd.s32 %s101, 1
      %p105 = scmp.eq.s32.totalorder %s20, 1
      %p106 = scmp.ne.s32.totalorder %s101, %s103
      %p107 = scmp.eq.s32.totalorder %s20, 0
      %p108 = por %p106, %p107
      %p109 = scmp.ne.s32.totalorder %s101, %s103
      %p110 = scmp.eq.s32.totalorder %s25, 1
      %p111 = por %p109, %p110
      %p112 = scmp.ne.s32.totalorder %s103, %s104
      %p113 = scmp.eq.s32.totalorder %s25, 0
      %p114 = por %p112, %p113
      %p115 = scmp.ne.s32.totalorder %s103, %s104
      %p116 = scmp.eq.s32.totalorder %s26, 1
      %p117 = por %p115, %p116
      %p119 = scmp.ne.s32.totalorder %s104, %s118
      %p120 = scmp.eq.s32.totalorder %s26, 0
      %p121 = por %p119, %p120
      %s123 = sadd.s32 %s122, 1
      %p126 = scmp.eq.s32.totalorder %s20, 1
      %p127 = scmp.ne.s32.totalorder %s122, %s124
      %p128 = scmp.eq.s32.totalorder %s20, 0
      %p129 = por %p127, %p128
      %p130 = scmp.ne.s32.totalorder %s122, %s124
      %p131 = scmp.eq.s32.totalorder %s25, 1
      %p132 = por %p130, %p131
      %p133 = scmp.ne.s32.totalorder %s124, %s125
      %p134 = scmp.eq.s32.totalorder %s25, 0
      %p135 = por %p133, %p134
      %p136 = scmp.ne.s32.totalorder %s124, %s125
      %p137 = scmp.eq.s32.totalorder %s26, 1
      %p138 = por %p136, %p137
      %p140 = scmp.ne.s32.totalorder %s125, %s139
      %p141 = scmp.eq.s32.totalorder %s26, 0
      %p142 = por %p140, %p141
      %s143 = ssub.s32 %s20, %s27
      %p144 = scmp.eq.s32.totalorder %s143, 0
      %s146 = sadd.s32 %s145, 1
      %s147 = scalar_select %p144, %s145, %s146
      %p150 = pneg %p144
      %p151 = scmp.eq.s32.totalorder %s20, 1
      %p152 = por %p150, %p151
      %p153 = scmp.ne.s32.totalorder %s145, %s148
      %p154 = scmp.eq.s32.totalorder %s20, 0
      %p155 = por %p153, %p154
      %p156 = scmp.ne.s32.totalorder %s145, %s148
      %p157 = scmp.eq.s32.totalorder %s25, 1
      %p158 = por %p156, %p157
      %p159 = scmp.ne.s32.totalorder %s148, %s149
      %p160 = scmp.eq.s32.totalorder %s25, 0
      %p161 = por %p159, %p160
      %p162 = scmp.ne.s32.totalorder %s148, %s149
      %p163 = scmp.eq.s32.totalorder %s26, 1
      %p164 = por %p162, %p163
      %p166 = scmp.ne.s32.totalorder %s149, %s165
      %p167 = scmp.eq.s32.totalorder %s26, 0
      %p168 = por %p166, %p167
      %s169 = ssub.s32 %s20, %s27
      %p170 = scmp.eq.s32.totalorder %s169, 0
      %s172 = sadd.s32 %s171, 1
      %s173 = scalar_select %p170, %s171, %s172
      %p176 = pneg %p170
      %p177 = scmp.eq.s32.totalorder %s20, 1
      %p178 = por %p176, %p177
      %p179 = scmp.ne.s32.totalorder %s171, %s174
      %p180 = scmp.eq.s32.totalorder %s20, 0
      %p181 = por %p179, %p180
      %p182 = scmp.ne.s32.totalorder %s171, %s174
      %p183 = scmp.eq.s32.totalorder %s25, 1
      %p184 = por %p182, %p183
      %p185 = scmp.ne.s32.totalorder %s174, %s175
      %p186 = scmp.eq.s32.totalorder %s25, 0
      %p187 = por %p185, %p186
      %p188 = scmp.ne.s32.totalorder %s174, %s175
      %p189 = scmp.eq.s32.totalorder %s26, 1
      %p190 = por %p188, %p189
      %p192 = scmp.ne.s32.totalorder %s175, %s191
      %p193 = scmp.eq.s32.totalorder %s26, 0
      %p194 = por %p192, %p193
      %s195 = ssub.s32 %s20, %s27
      %p196 = scmp.eq.s32.totalorder %s195, 0
      %s198 = sadd.s32 %s197, 1
      %s199 = scalar_select %p196, %s197, %s198
      %p202 = pneg %p196
      %p203 = scmp.eq.s32.totalorder %s20, 1
      %p204 = por %p202, %p203
      %p205 = scmp.ne.s32.totalorder %s197, %s200
      %p206 = scmp.eq.s32.totalorder %s20, 0
      %p207 = por %p205, %p206
      %p208 = scmp.ne.s32.totalorder %s197, %s200
      %p209 = scmp.eq.s32.totalorder %s25, 1
      %p210 = por %p208, %p209
      %p211 = scmp.ne.s32.totalorder %s200, %s201
      %p212 = scmp.eq.s32.totalorder %s25, 0
      %p213 = por %p211, %p212
      %p214 = scmp.ne.s32.totalorder %s200, %s201
      %p215 = scmp.eq.s32.totalorder %s26, 1
      %p216 = por %p214, %p215
      %p218 = scmp.ne.s32.totalorder %s201, %s217
      %p219 = scmp.eq.s32.totalorder %s26, 0
      %p220 = por %p218, %p219
      %s221 = ssub.s32 %s20, %s27
      %p222 = scmp.eq.s32.totalorder %s221, 0
      %s224 = sadd.s32 %s223, 1
      %s225 = scalar_select %p222, %s223, %s224
      %p228 = pneg %p222
      %p229 = scmp.eq.s32.totalorder %s20, 1
      %p230 = por %p228, %p229
      %p231 = scmp.ne.s32.totalorder %s223, %s226
      %p232 = scmp.eq.s32.totalorder %s20, 0
      %p233 = por %p231, %p232
      %p234 = scmp.ne.s32.totalorder %s223, %s226
      %p235 = scmp.eq.s32.totalorder %s25, 1
      %p236 = por %p234, %p235
      %p237 = scmp.ne.s32.totalorder %s226, %s227
      %p238 = scmp.eq.s32.totalorder %s25, 0
      %p239 = por %p237, %p238
      %p240 = scmp.ne.s32.totalorder %s226, %s227
      %p241 = scmp.eq.s32.totalorder %s26, 1
      %p242 = por %p240, %p241
      %p244 = scmp.ne.s32.totalorder %s227, %s243
      %p245 = scmp.eq.s32.totalorder %s26, 0
      %p246 = por %p244, %p245
      %s247 = ssub.s32 %s20, %s27
      %p248 = scmp.eq.s32.totalorder %s247, 0
      %s250 = sadd.s32 %s249, 1
      %s251 = scalar_select %p248, %s249, %s250
      %p254 = pneg %p248
      %p255 = scmp.eq.s32.totalorder %s20, 1
      %p256 = por %p254, %p255
      %p257 = scmp.ne.s32.totalorder %s249, %s252
      %p258 = scmp.eq.s32.totalorder %s20, 0
      %p259 = por %p257, %p258
      %p260 = scmp.ne.s32.totalorder %s249, %s252
      %p261 = scmp.eq.s32.totalorder %s25, 1
      %p262 = por %p260, %p261
      %p263 = scmp.ne.s32.totalorder %s252, %s253
      %p264 = scmp.eq.s32.totalorder %s25, 0
      %p265 = por %p263, %p264
      %p266 = scmp.ne.s32.totalorder %s252, %s253
      %p267 = scmp.eq.s32.totalorder %s26, 1
      %p268 = por %p266, %p267
      %p270 = scmp.ne.s32.totalorder %s253, %s269
      %p271 = scmp.eq.s32.totalorder %s26, 0
      %p272 = por %p270, %p271
      %p273 = scmp.le.s32.totalorder 1, %s20
      %p274 = scmp.lt.s32.totalorder %s20, 3
      %p275 = pnand %p273, %p274
      %p276 = pneg %p275
      // Predicated region
      $region9: #{tpu_custom_call.1} parent=5 // pred_check
        _
      $region10: #{tpu_custom_call.1} parent=5 // pred_check_branch
        %278 = sbr.rel (%p275) target = $region12
      $region11: #{tpu_custom_call.1} parent=5 // pred_region
        %s279 = ssub.s32 %s20, 1
        // Predicated region
        $region13: #{tpu_custom_call.1} parent=11 // pred_check
          %p280 = pneg %p46
        $region14: #{tpu_custom_call.1} parent=11 // pred_check_branch
          %282 = sbr.rel (%p280) target = $region16
        $region15: #{tpu_custom_call.1} parent=11 // pred_region
          %s284 = ssub.s32 128, 128
          %285 = vsyncadd [#allocation3], %s284
          %s286 = smul.addr %s25, 2
          %s287 = smul.addr %s286, 64
          %s288 = scalar_lea.hbm %s0, %s287
          %s289 = sshll.u32 [#allocation2], 4
          %s290 = int_to_ptr.vmem [resolvable:$true] %s289
          %295 = dma.hbm_to_vmem [thread:$0]  %s288, 128, %s290, [#allocation3], 64, 64, 4
        $region16: #{tpu_custom_call.1} parent=11 // pred_fallthru
          _
        // Predicated region
        $region17: #{tpu_custom_call.1} parent=11 // pred_check
          %p296 = pneg %p72
        $region18: #{tpu_custom_call.1} parent=11 // pred_check_branch
          %298 = sbr.rel (%p296) target = $region20
        $region19: #{tpu_custom_call.1} parent=11 // pred_region
          %s300 = ssub.s32 128, 128
          %301 = vsyncadd [#allocation6], %s300
          %s302 = smul.addr %s25, 2
          %s303 = smul.addr %s302, 64
          %s304 = scalar_lea.hbm %s1, %s303
          %s305 = sshll.u32 [#allocation5], 4
          %s306 = int_to_ptr.vmem [resolvable:$true] %s305
          %311 = dma.hbm_to_vmem [thread:$0]  %s304, 128, %s306, [#allocation6], 64, 64, 4
        $region20: #{tpu_custom_call.1} parent=11 // pred_fallthru
          _
        // Predicated region
        $region21: #{tpu_custom_call.1} parent=11 // pred_check
          %p312 = pneg %p93
        $region22: #{tpu_custom_call.1} parent=11 // pred_check_branch
          %314 = sbr.rel (%p312) target = $region24
        $region23: #{tpu_custom_call.1} parent=11 // pred_region
          _
        $region24: #{tpu_custom_call.1} parent=11 // pred_fallthru
          _
        // Predicated region
        $region25: #{tpu_custom_call.1} parent=11 // pred_check
          %p315 = pneg %p114
        $region26: #{tpu_custom_call.1} parent=11 // pred_check_branch
          %317 = sbr.rel (%p315) target = $region28
        $region27: #{tpu_custom_call.1} parent=11 // pred_region
          _
        $region28: #{tpu_custom_call.1} parent=11 // pred_fallthru
          _
        // Predicated region
        $region29: #{tpu_custom_call.1} parent=11 // pred_check
          %p318 = pneg %p135
        $region30: #{tpu_custom_call.1} parent=11 // pred_check_branch
          %320 = sbr.rel (%p318) target = $region32
        $region31: #{tpu_custom_call.1} parent=11 // pred_region
          _
        $region32: #{tpu_custom_call.1} parent=11 // pred_fallthru
          _
        // Predicated region
        $region33: #{tpu_custom_call.1} parent=11 // pred_check
          %p321 = pneg %p161
        $region34: #{tpu_custom_call.1} parent=11 // pred_check_branch
          %323 = sbr.rel (%p321) target = $region36
        $region35: #{tpu_custom_call.1} parent=11 // pred_region
          %p324 = scmp.lt.s32.totalorder %s25, 1
          %s325 = scalar_select %p324, %s25, 1
          %s326 = scalar_lea.vmem %s5, %s325
        $region36: #{tpu_custom_call.1} parent=11 // pred_fallthru
          _
        // Predicated region
        $region37: #{tpu_custom_call.1} parent=11 // pred_check
          %p327 = pneg %p187
        $region38: #{tpu_custom_call.1} parent=11 // pred_check_branch
          %329 = sbr.rel (%p327) target = $region40
        $region39: #{tpu_custom_call.1} parent=11 // pred_region
          %p330 = scmp.lt.s32.totalorder %s25, 1
          %s331 = scalar_select %p330, %s25, 1
          %s332 = scalar_lea.vmem %s6, %s331
        $region40: #{tpu_custom_call.1} parent=11 // pred_fallthru
          _
        // Predicated region
        $region41: #{tpu_custom_call.1} parent=11 // pred_check
          %p333 = pneg %p213
        $region42: #{tpu_custom_call.1} parent=11 // pred_check_branch
          %335 = sbr.rel (%p333) target = $region44
        $region43: #{tpu_custom_call.1} parent=11 // pred_region
          %s337 = ssub.s32 256, 256
          %338 = vsyncadd [#allocation6], %s337
          %s339 = smul.addr %s25, 4
          %s340 = smul.addr %s339, 64
          %s341 = scalar_lea.hbm %s7, %s340
          %s342 = sshll.u32 [#allocation7], 4
          %s343 = int_to_ptr.vmem [resolvable:$true] %s342
          %348 = dma.hbm_to_vmem [thread:$0]  %s341, 256, %s343, [#allocation6], 64, 64, 4
        $region44: #{tpu_custom_call.1} parent=11 // pred_fallthru
          _
        // Predicated region
        $region45: #{tpu_custom_call.1} parent=11 // pred_check
          %p349 = pneg %p239
        $region46: #{tpu_custom_call.1} parent=11 // pred_check_branch
          %351 = sbr.rel (%p349) target = $region48
        $region47: #{tpu_custom_call.1} parent=11 // pred_region
          %p352 = scmp.lt.s32.totalorder %s25, 1
          %s353 = scalar_select %p352, %s25, 1
          %s354 = scalar_lea.vmem %s8, %s353
        $region48: #{tpu_custom_call.1} parent=11 // pred_fallthru
          _
      $region12: #{tpu_custom_call.1} parent=5 // pred_fallthru
        _
      %p355 = scmp.lt.s32.totalorder %s20, 2
      // Predicated region
      $region49: #{tpu_custom_call.1} parent=5 // pred_check
        %p356 = pneg %p355
      $region50: #{tpu_custom_call.1} parent=5 // pred_check_branch
        %358 = sbr.rel (%p356) target = $region52
      $region51: #{tpu_custom_call.1} parent=5 // pred_region
        _
      $region52: #{tpu_custom_call.1} parent=5 // pred_fallthru
        _
      %p359 = scmp.le.s32.totalorder 1, %s20
      %p360 = scmp.lt.s32.totalorder %s20, 3
      %p361 = pnand %p359, %p360
      %p362 = pneg %p361
      // Predicated region
      $region53: #{tpu_custom_call.1} parent=5 // pred_check
        _
      $region54: #{tpu_custom_call.1} parent=5 // pred_check_branch
        %364 = sbr.rel (%p361) target = $region56
      $region55: #{tpu_custom_call.1} parent=5 // pred_region
        %s365 = ssub.s32 %s20, 1
        // Predicated region
        $region57: #{tpu_custom_call.1} parent=55 // pred_check
          %p366 = pneg %p46
        $region58: #{tpu_custom_call.1} parent=55 // pred_check_branch
          %368 = sbr.rel (%p366) target = $region60
        $region59: #{tpu_custom_call.1} parent=55 // pred_region
          %369 = dma.done [#allocation3], 128
        $region60: #{tpu_custom_call.1} parent=55 // pred_fallthru
          _
        // Predicated region
        $region61: #{tpu_custom_call.1} parent=55 // pred_check
          %p370 = pneg %p72
        $region62: #{tpu_custom_call.1} parent=55 // pred_check_branch
          %372 = sbr.rel (%p370) target = $region64
        $region63: #{tpu_custom_call.1} parent=55 // pred_region
          %373 = dma.done [#allocation6], 128
        $region64: #{tpu_custom_call.1} parent=55 // pred_fallthru
          _
        // Predicated region
        $region65: #{tpu_custom_call.1} parent=55 // pred_check
          %p374 = pneg %p213
        $region66: #{tpu_custom_call.1} parent=55 // pred_check_branch
          %376 = sbr.rel (%p374) target = $region68
        $region67: #{tpu_custom_call.1} parent=55 // pred_region
          %377 = dma.done [#allocation6], 256
        $region68: #{tpu_custom_call.1} parent=55 // pred_fallthru
          _
        %p378 = pneg %p46
        %p379 = pneg %p43
        %p380 = pneg %p72
        %p381 = pneg %p69
        %p382 = pneg %p93
        %p383 = pneg %p90
        %p384 = pneg %p114
        %p385 = pneg %p111
        %p386 = pneg %p135
        %p387 = pneg %p132
        %p388 = scmp.lt.s32.totalorder %s25, 1
        %s389 = scalar_select %p388, %s25, 1
        %s390 = scalar_lea.vmem %s5, %s389
        %p391 = pneg %p161
        %p392 = pneg %p158
        %p393 = scmp.lt.s32.totalorder %s25, 1
        %s394 = scalar_select %p393, %s25, 1
        %s395 = scalar_lea.vmem %s6, %s394
        %p396 = pneg %p187
        %p397 = pneg %p184
        %p398 = pneg %p213
        %p399 = pneg %p210
        %p400 = scmp.lt.s32.totalorder %s25, 1
        %s401 = scalar_select %p400, %s25, 1
        %s402 = scalar_lea.vmem %s8, %s401
        %p403 = pneg %p239
        %p404 = pneg %p236
        %p405 = pneg %p265
        %p406 = pneg %p262
        %s407 = sand.u32 %s252, 1
        %s408 = scalar_lea.sflag [#allocation4], %s407
        %s409 = sand.u32 %s252, 1
        %s410 = smul.addr %s409, 2
        %s411 = scalar_lea.vmem [#allocation8], %s410
        %p412 = scmp.lt.s32.totalorder %s25, 1
        %s413 = scalar_select %p412, %s25, 1
        %s414 = scalar_lea.vmem %s5, %s413
        %p415 = scmp.lt.s32.totalorder %s25, 1
        %s416 = scalar_select %p415, %s25, 1
        %s417 = scalar_lea.vmem %s6, %s416
        %p418 = scmp.lt.s32.totalorder %s25, 1
        %s419 = scalar_select %p418, %s25, 1
        %s420 = scalar_lea.vmem %s8, %s419
        %v422 = vld [vmem:[#allocation2] sm:$0xf]
        %v423 = vld [vmem:[#allocation2 + $0x4] sm:$0xf]
        %v424 = vld [vmem:[#allocation5] sm:$0xf]
        %v425 = vld [vmem:[#allocation5 + $0x4] sm:$0xf]
        %v426 = vld [vmem:[%s2] sm:$0xf]
        %v427 = vld [vmem:[%s2 + $0x4] sm:$0xf]
        %v428 = vld [vmem:[%s3] sm:$0x1]
        %v429 = vld [vmem:[%s4] sm:$0x1]
        %v430 = vld [vmem:[%s414] sm:$0x1]
        %v431 = vld [vmem:[%s417] sm:$0x1]
        %v433 = vlaneseq
        %v434 = vshrl.u32 %v433, 7
        %v435 = vsub.s32 0, %v434
        %v436 = vrot.slane %v431, %v435
        %v440 = vunpack.c.l.b16 %v422
        %v441 = vunpack.c.l.b16 %v423
        %v442 = vpack.c.b16 %v441, %v440
        %v445 = vunpack.c.l.b16 %v424
        %v446 = vunpack.c.l.b16 %v425
        %v447 = vpack.c.b16 %v446, %v445
        %vm449 = vcmask 130048
        %v451 = vsel %vm449, %v442, 0
        %453 = vmatprep.subr.bf16.mxu0 0
        %454 = vmatpush1.bf16.msra.mxu0 0
        %455 = vmatprep.subr.bf16.mxu0 0
        %456 = vmatpush1.bf16.msra.mxu0 0
        %457 = vmatprep.subr.bf16.mxu0 0
        %458 = vmatpush1.bf16.msra.mxu0 0
        %459 = vmatprep.subr.bf16.mxu0 0
        %460 = vmatpush1.bf16.msra.mxu0 0
        %461 = vmatprep.subr.bf16.mxu0 0
        %462 = vmatpush1.bf16.msra.mxu0 0
        %463 = vmatprep.subr.bf16.mxu0 0
        %464 = vmatpush1.bf16.msra.mxu0 0
        %465 = vmatprep.subr.bf16.mxu0 0
        %466 = vmatpush1.bf16.msra.mxu0 0
        %467 = vmatprep.subr.bf16.mxu0 0
        %468 = vmatpush1.bf16.msra.mxu0 %v447
        %469 = vmatprep.subr.bf16.mxu0 0
        %470 = vmatpush2.bf16.msra.mxu0 0
        %471 = vmatprep.subr.bf16.mxu0 0
        %472 = vmatpush2.bf16.msra.mxu0 0
        %473 = vmatprep.subr.bf16.mxu0 0
        %474 = vmatpush2.bf16.msra.mxu0 0
        %475 = vmatprep.subr.bf16.mxu0 0
        %476 = vmatpush2.bf16.msra.mxu0 0
        %477 = vmatprep.subr.bf16.mxu0 0
        %478 = vmatpush2.bf16.msra.mxu0 0
        %479 = vmatprep.subr.bf16.mxu0 0
        %480 = vmatpush2.bf16.msra.mxu0 0
        %481 = vmatprep.subr.bf16.mxu0 0
        %482 = vmatpush2.bf16.msra.mxu0 0
        %483 = vmatprep.subr.bf16.mxu0 0
        %484 = vmatpush2.bf16.msra.mxu0 0
        %485 = vmatprep.mubr.bf16.mxu0 0
        %486 = vmatmul.mubr.bf16.gmra.mxu0 %v451
        %v487 = vpop.f32.mrf.mxu0
        %v488 = vadd.f32 %v436, %v487
        %v489 = vpop.f32.mrf.mxu0
        %v490 = vpop.f32.mrf.mxu0
        %v491 = vadd.f32 %v436, %v490
        %v492 = vpop.f32.mrf.mxu0
        %493 = vdwg.mxu0
        %v494 = vmax.f32 %v488, 0.0
        %v495 = vmax.f32 %v491, 0.0
        %v496 = vpack.c.bf16 %v495, %v494
        %v497 = vld [vmem:[#allocation7] sm:$0xf]
        %v498 = vld [vmem:[#allocation7 + $0x4] sm:$0xf]
        %v499 = vld [vmem:[#allocation7 + $0x8] sm:$0xf]
        %v500 = vld [vmem:[#allocation7 + $0xc] sm:$0xf]
        %v503 = vunpack.c.l.b16 %v426
        %v504 = vunpack.c.l.b16 %v427
        %v505 = vpack.c.b16 %v504, %v503
        %vm506 = vcmask 15360
        %v508 = vsel %vm506, %v505, 0
        %vm510 = vcmask 1040384
        %v512 = vsel %vm510, %v430, 0
        %514 = vmatprep.subr.bf16.mxu0 0
        %515 = vmatpush1.bf16.msra.mxu0 0
        %516 = vmatprep.subr.bf16.mxu0 0
        %517 = vmatpush1.bf16.msra.mxu0 0
        %518 = vmatprep.subr.bf16.mxu0 0
        %519 = vmatpush1.bf16.msra.mxu0 0
        %520 = vmatprep.subr.bf16.mxu0 0
        %521 = vmatpush1.bf16.msra.mxu0 0
        %522 = vmatprep.subr.bf16.mxu0 0
        %523 = vmatpush1.bf16.msra.mxu0 0
        %524 = vmatprep.subr.bf16.mxu0 0
        %525 = vmatpush1.bf16.msra.mxu0 0
        %526 = vmatprep.subr.bf16.mxu0 0
        %527 = vmatpush1.bf16.msra.mxu0 0
        %528 = vmatprep.subr.bf16.mxu0 0
        %529 = vmatpush1.bf16.msra.mxu0 %v512
        %530 = vmatprep.subr.bf16.mxu0 0
        %531 = vmatpush2.bf16.msra.mxu0 0
        %532 = vmatprep.subr.bf16.mxu0 0
        %533 = vmatpush2.bf16.msra.mxu0 0
        %534 = vmatprep.subr.bf16.mxu0 0
        %535 = vmatpush2.bf16.msra.mxu0 0
        %536 = vmatprep.subr.bf16.mxu0 0
        %537 = vmatpush2.bf16.msra.mxu0 0
        %538 = vmatprep.subr.bf16.mxu0 0
        %539 = vmatpush2.bf16.msra.mxu0 0
        %540 = vmatprep.subr.bf16.mxu0 0
        %541 = vmatpush2.bf16.msra.mxu0 0
        %542 = vmatprep.subr.bf16.mxu0 0
        %543 = vmatpush2.bf16.msra.mxu0 0
        %544 = vmatprep.subr.bf16.mxu0 0
        %545 = vmatpush2.bf16.msra.mxu0 0
        %546 = vmatprep.mubr.bf16.mxu0 0
        %547 = vmatmul.mubr.bf16.gmra.mxu0 %v508
        %v548 = vpop.f32.mrf.mxu0
        %v549 = vadd.f32 0.0, %v548
        %v550 = vpop.f32.mrf.mxu0
        %v551 = vpop.f32.mrf.mxu0
        %v552 = vadd.f32 0.0, %v551
        %v553 = vpop.f32.mrf.mxu0
        %554 = vdwg.mxu0
        %v559 = vunpack.c.l.b16 %v497
        %v560 = vunpack.c.l.b16 %v498
        %v561 = vunpack.c.l.b16 %v499
        %v562 = vunpack.c.l.b16 %v500
        %v563 = vpack.c.b16 %v560, %v559
        %v564 = vpack.c.b16 %v562, %v561
        %vm567 = vcmask 261120
        %v569 = vsel %vm567, %v496, 0
        %571 = vmatprep.subr.bf16.mxu0 0
        %572 = vmatpush1.bf16.msra.mxu0 0
        %573 = vmatprep.subr.bf16.mxu0 0
        %574 = vmatpush1.bf16.msra.mxu0 0
        %575 = vmatprep.subr.bf16.mxu0 0
        %576 = vmatpush1.bf16.msra.mxu0 0
        %577 = vmatprep.subr.bf16.mxu0 0
        %578 = vmatpush1.bf16.msra.mxu0 0
        %579 = vmatprep.subr.bf16.mxu0 0
        %580 = vmatpush1.bf16.msra.mxu0 0
        %581 = vmatprep.subr.bf16.mxu0 0
        %582 = vmatpush1.bf16.msra.mxu0 0
        %583 = vmatprep.subr.bf16.mxu0 0
        %584 = vmatpush1.bf16.msra.mxu0 %v564
        %585 = vmatprep.subr.bf16.mxu0 0
        %586 = vmatpush1.bf16.msra.mxu0 %v563
        %587 = vmatprep.subr.bf16.mxu0 0
        %588 = vmatpush2.bf16.msra.mxu0 0
        %589 = vmatprep.subr.bf16.mxu0 0
        %590 = vmatpush2.bf16.msra.mxu0 0
        %591 = vmatprep.subr.bf16.mxu0 0
        %592 = vmatpush2.bf16.msra.mxu0 0
        %593 = vmatprep.subr.bf16.mxu0 0
        %594 = vmatpush2.bf16.msra.mxu0 0
        %595 = vmatprep.subr.bf16.mxu0 0
        %596 = vmatpush2.bf16.msra.mxu0 0
        %597 = vmatprep.subr.bf16.mxu0 0
        %598 = vmatpush2.bf16.msra.mxu0 0
        %599 = vmatprep.subr.bf16.mxu0 0
        %600 = vmatpush2.bf16.msra.mxu0 0
        %601 = vmatprep.subr.bf16.mxu0 0
        %602 = vmatpush2.bf16.msra.mxu0 0
        %603 = vmatprep.mubr.bf16.mxu0 0
        %604 = vmatmul.mubr.bf16.gmra.mxu0 %v569
        %v605 = vpop.f32.mrf.mxu0
        %v606 = vadd.f32 %v549, %v605
        %v607 = vpop.f32.mrf.mxu0
        %v608 = vpop.f32.mrf.mxu0
        %v609 = vadd.f32 %v552, %v608
        %v610 = vpop.f32.mrf.mxu0
        %611 = vdwg.mxu0
        %v612 = vpack.c.bf16 %v609, %v606
        %v613 = vld [vmem:[%s420] sm:$0x1]
        %v615 = vlaneseq
        %v616 = vshrl.u32 %v615, 7
        %v617 = vsub.s32 0, %v616
        %v618 = vrot.slane %v613, %v617
        %620 = vmatprep.subr.bf16.mxu0 0
        %621 = vmatpush1.bf16.msra.mxu0 0
        %622 = vmatprep.subr.bf16.mxu0 0
        %623 = vmatpush1.bf16.msra.mxu0 0
        %624 = vmatprep.subr.bf16.mxu0 0
        %625 = vmatpush1.bf16.msra.mxu0 0
        %626 = vmatprep.subr.bf16.mxu0 0
        %627 = vmatpush1.bf16.msra.mxu0 0
        %628 = vmatprep.subr.bf16.mxu0 0
        %629 = vmatpush1.bf16.msra.mxu0 0
        %630 = vmatprep.subr.bf16.mxu0 0
        %631 = vmatpush1.bf16.msra.mxu0 0
        %632 = vmatprep.subr.bf16.mxu0 0
        %633 = vmatpush1.bf16.msra.mxu0 0
        %634 = vmatprep.subr.bf16.mxu0 0
        %635 = vmatpush1.bf16.msra.mxu0 %v612
        %636 = vmatprep.subr.bf16.mxu0 0
        %637 = vmatpush2.bf16.msra.mxu0 0
        %638 = vmatprep.subr.bf16.mxu0 0
        %639 = vmatpush2.bf16.msra.mxu0 0
        %640 = vmatprep.subr.bf16.mxu0 0
        %641 = vmatpush2.bf16.msra.mxu0 0
        %642 = vmatprep.subr.bf16.mxu0 0
        %643 = vmatpush2.bf16.msra.mxu0 0
        %644 = vmatprep.subr.bf16.mxu0 0
        %645 = vmatpush2.bf16.msra.mxu0 0
        %646 = vmatprep.subr.bf16.mxu0 0
        %647 = vmatpush2.bf16.msra.mxu0 0
        %648 = vmatprep.subr.bf16.mxu0 0
        %649 = vmatpush2.bf16.msra.mxu0 0
        %650 = vmatprep.subr.bf16.mxu0 0
        %651 = vmatpush2.bf16.msra.mxu0 0
        %652 = vmatprep.mubr.bf16.mxu0 0
        %653 = vmatmul.mubr.bf16.gmra.mxu0 %v451
        %v654 = vpop.f32.mrf.mxu0
        %v655 = vadd.f32 %v618, %v654
        %v656 = vpop.f32.mrf.mxu0
        %v657 = vpop.f32.mrf.mxu0
        %v658 = vadd.f32 %v618, %v657
        %v659 = vpop.f32.mrf.mxu0
        %660 = vdwg.mxu0
        %v661 = vmax.f32 %v655, 0.0
        %v662 = vmax.f32 %v658, 0.0
        %v663 = vpack.c.bf16 %v662, %v661
        %v665 = vsel %vm449, %v428, 0
        %667 = vmatprep.subr.bf16.mxu0 0
        %668 = vmatpush1.bf16.msra.mxu0 0
        %669 = vmatprep.subr.bf16.mxu0 0
        %670 = vmatpush1.bf16.msra.mxu0 0
        %671 = vmatprep.subr.bf16.mxu0 0
        %672 = vmatpush1.bf16.msra.mxu0 0
        %673 = vmatprep.subr.bf16.mxu0 0
        %674 = vmatpush1.bf16.msra.mxu0 0
        %675 = vmatprep.subr.bf16.mxu0 0
        %676 = vmatpush1.bf16.msra.mxu0 0
        %677 = vmatprep.subr.bf16.mxu0 0
        %678 = vmatpush1.bf16.msra.mxu0 0
        %679 = vmatprep.subr.bf16.mxu0 0
        %680 = vmatpush1.bf16.msra.mxu0 0
        %681 = vmatprep.subr.bf16.mxu0 0
        %682 = vmatpush1.bf16.msra.mxu0 %v663
        %683 = vmatprep.subr.bf16.mxu0 0
        %684 = vmatpush2.bf16.msra.mxu0 0
        %685 = vmatprep.subr.bf16.mxu0 0
        %686 = vmatpush2.bf16.msra.mxu0 0
        %687 = vmatprep.subr.bf16.mxu0 0
        %688 = vmatpush2.bf16.msra.mxu0 0
        %689 = vmatprep.subr.bf16.mxu0 0
        %690 = vmatpush2.bf16.msra.mxu0 0
        %691 = vmatprep.subr.bf16.mxu0 0
        %692 = vmatpush2.bf16.msra.mxu0 0
        %693 = vmatprep.subr.bf16.mxu0 0
        %694 = vmatpush2.bf16.msra.mxu0 0
        %695 = vmatprep.subr.bf16.mxu0 0
        %696 = vmatpush2.bf16.msra.mxu0 0
        %697 = vmatprep.subr.bf16.mxu0 0
        %698 = vmatpush2.bf16.msra.mxu0 0
        %699 = vmatprep.mubr.bf16.mxu0 0
        %700 = vmatmul.mubr.bf16.gmra.mxu0 %v665
        %v701 = vpop.f32.mrf.mxu0
        %v702 = vadd.f32 0.0, %v701
        %v703 = vpop.f32.mrf.mxu0
        %v704 = vpop.f32.mrf.mxu0
        %v705 = vpop.f32.mrf.mxu0
        %706 = vdwg.mxu0
        %v707 = vpack.c.bf16 %v491, %v488
        %v709 = vsel %vm449, %v429, 0
        %711 = vmatprep.subr.bf16.mxu0 0
        %712 = vmatpush1.bf16.msra.mxu0 0
        %713 = vmatprep.subr.bf16.mxu0 0
        %714 = vmatpush1.bf16.msra.mxu0 0
        %715 = vmatprep.subr.bf16.mxu0 0
        %716 = vmatpush1.bf16.msra.mxu0 0
        %717 = vmatprep.subr.bf16.mxu0 0
        %718 = vmatpush1.bf16.msra.mxu0 0
        %719 = vmatprep.subr.bf16.mxu0 0
        %720 = vmatpush1.bf16.msra.mxu0 0
        %721 = vmatprep.subr.bf16.mxu0 0
        %722 = vmatpush1.bf16.msra.mxu0 0
        %723 = vmatprep.subr.bf16.mxu0 0
        %724 = vmatpush1.bf16.msra.mxu0 0
        %725 = vmatprep.subr.bf16.mxu0 0
        %726 = vmatpush1.bf16.msra.mxu0 %v707
        %727 = vmatprep.subr.bf16.mxu0 0
        %728 = vmatpush2.bf16.msra.mxu0 0
        %729 = vmatprep.subr.bf16.mxu0 0
        %730 = vmatpush2.bf16.msra.mxu0 0
        %731 = vmatprep.subr.bf16.mxu0 0
        %732 = vmatpush2.bf16.msra.mxu0 0
        %733 = vmatprep.subr.bf16.mxu0 0
        %734 = vmatpush2.bf16.msra.mxu0 0
        %735 = vmatprep.subr.bf16.mxu0 0
        %736 = vmatpush2.bf16.msra.mxu0 0
        %737 = vmatprep.subr.bf16.mxu0 0
        %738 = vmatpush2.bf16.msra.mxu0 0
        %739 = vmatprep.subr.bf16.mxu0 0
        %740 = vmatpush2.bf16.msra.mxu0 0
        %741 = vmatprep.subr.bf16.mxu0 0
        %742 = vmatpush2.bf16.msra.mxu0 0
        %743 = vmatprep.mubr.bf16.mxu0 0
        %744 = vmatmul.mubr.bf16.gmra.mxu0 %v709
        %v745 = vpop.f32.mrf.mxu0
        %v746 = vadd.f32 0.0, %v745
        %v747 = vpop.f32.mrf.mxu0
        %v748 = vpop.f32.mrf.mxu0
        %v749 = vpop.f32.mrf.mxu0
        %750 = vdwg.mxu0
        %752 = vrot.lane.b32.xlu0 %v746, 32
        %v753 = vpop.permute.xlu0 %752
        %v755 = vsel %vm567, %v702, %v753
        %vm756 = vcmask 523264
        %v757 = vsel %vm756, %v755, 0.0
        %758 = vst [vmem:[%s411] sm:$0x3] %v757
        %s759 = sand.u32 %s252, 1
        %s760 = scalar_lea.sflag [#allocation4], %s759
        %s761 = sand.u32 %s252, 1
        %s762 = smul.addr %s761, 2
        %s763 = scalar_lea.vmem [#allocation8], %s762
        // Predicated region
        $region69: #{tpu_custom_call.1} parent=55 // pred_check
          %p764 = pneg %p262
        $region70: #{tpu_custom_call.1} parent=55 // pred_check_branch
          %766 = sbr.rel (%p764) target = $region72
        $region71: #{tpu_custom_call.1} parent=55 // pred_region
          %s768 = ssub.s32 32, 32
          %769 = vsyncadd %s760, %s768
          %s770 = smul.addr %s25, 32
          %s771 = scalar_lea.hbm %s9, %s770
          %s773 = sshll.u32 %s763, 4
          %s774 = int_to_ptr.vmem [resolvable:$true] %s773
          %776 = dma.vmem_to_hbm [thread:$0]  %s774, 32, %s771, %s760
        $region72: #{tpu_custom_call.1} parent=55 // pred_fallthru
          _
      $region56: #{tpu_custom_call.1} parent=5 // pred_fallthru
        _
      %p777 = scmp.le.s32.totalorder 2, %s20
      // Predicated region
      $region73: #{tpu_custom_call.1} parent=5 // pred_check
        %p778 = pneg %p777
      $region74: #{tpu_custom_call.1} parent=5 // pred_check_branch
        %780 = sbr.rel (%p778) target = $region76
      $region75: #{tpu_custom_call.1} parent=5 // pred_region
        %s781 = ssub.s32 %s20, 2
        // Predicated region
        $region77: #{tpu_custom_call.1} parent=75 // pred_check
          %p782 = pneg %p268
        $region78: #{tpu_custom_call.1} parent=75 // pred_check_branch
          %784 = sbr.rel (%p782) target = $region80
        $region79: #{tpu_custom_call.1} parent=75 // pred_region
          %s785 = sand.u32 %s253, 1
          %s786 = scalar_lea.sflag [#allocation4], %s785
          %s787 = sand.u32 %s253, 1
          %s788 = smul.addr %s787, 2
          %s789 = scalar_lea.vmem [#allocation8], %s788
          %790 = dma.done %s786, 32
        $region80: #{tpu_custom_call.1} parent=75 // pred_fallthru
          _
      $region76: #{tpu_custom_call.1} parent=5 // pred_fallthru
        _
    $region6: #{tpu_custom_call.1} parent=1 // loop_footer
      %s24 = sadd.s32 1, %s20
    $region7: #{tpu_custom_call.1} parent=1 // loop_footer_branch
      %19 = sbr.rel target = $region3
    $region8: #{tpu_custom_call.1} parent=1 // loop_exit
      _
    %791 = vsyncpa [#allocation3], 1
    %s792 = scalar_lea.sflag [#allocation3], 1
    %793 = vsyncpa %s792, 1
    %794 = vsyncpa [#allocation6], 1
    %795 = vsyncpa [#allocation4], 1
    %s796 = scalar_lea.sflag [#allocation4], 1
    %797 = vsyncpa %s796, 1

// kernel: tpu_custom_call.1
$region0: #{tpu_custom_call.1}
  #allocation0 [shape = 'u32[]', space=smem, size = 0x4, offset = 0x4, fixed_abs, tag = 'smem constant byte address 0x4 - core index']
  #allocation1 [shape = 'u32[144,128]{1,0:T(1,128)}', space=vmem, size = 0x12000, scoped, tag = 'internal scratch']
  %s0 = inlined_call_operand.hbm [shape: bf16[2,16,16], index: 0, kind: input, shape index: {}]
  %s1 = inlined_call_operand.hbm [shape: bf16[2,16,32], index: 1, kind: input, shape index: {}]
  %s2 = inlined_call_operand.vmem [shape: bf16[16,2], index: 2, kind: input, shape index: {}]
  %s3 = inlined_call_operand.vmem [shape: bf16[2,16], index: 3, kind: input, shape index: {}]
  %s4 = inlined_call_operand.vmem [shape: bf16[2,16], index: 4, kind: input, shape index: {}]
  %s5 = inlined_call_operand.vmem [shape: bf16[2,2,32], index: 5, kind: input, shape index: {}]
  %s6 = inlined_call_operand.vmem [shape: f32[2,1,32], index: 6, kind: input, shape index: {}]
  %s7 = inlined_call_operand.hbm [shape: bf16[2,32,32], index: 7, kind: input, shape index: {}]
  %s8 = inlined_call_operand.vmem [shape: f32[2,1,32], index: 8, kind: input, shape index: {}]
  %s9 = inlined_call_operand.hbm [shape: f32[2,2,128], index: 9, kind: output, shape index: {}]
  %s10 = sld [smem:[#allocation0]]
  $region81: #{tpu_custom_call.1} parent=0
    _
  %s12 = ssub.s32 1, %s10
  %s13 = scalar_select 0, %s12, %s10
  $region1: #{tpu_custom_call.1} parent=0
    #allocation2 [shape = 'u8[8192]{0}', space=vmem, size = 0x2000, scoped, tag = 'input window, operand 0']
    #allocation3 [shape = 's32[2]{0}', space=sflag, size = 0x8, scoped, tag = 'scoped memory for tpu_custom_call.1']
    #allocation4 [shape = 's32[2]{0}', space=sflag, size = 0x8, scoped, tag = 'scoped memory for tpu_custom_call.1']
    #allocation5 [shape = 'u8[8192]{0}', space=vmem, size = 0x2000, scoped, tag = 'input window, operand 1']
    #allocation6 [shape = 's32[2]{0}', space=sflag, size = 0x8, scoped, tag = 'scoped memory for tpu_custom_call.1']
    #allocation7 [shape = 'u8[16384]{0}', space=vmem, size = 0x4000, scoped, tag = 'input window, operand 7']
    #allocation8 [shape = 'u8[2048]{0}', space=vmem, size = 0x800, scoped, tag = 'output window, operand 0']
    %14 = vsyncpa [#allocation3], 0
    %s15 = scalar_lea.sflag [#allocation3], 1
    %16 = vsyncpa %s15, 0
    %17 = vsyncpa [#allocation6], 0
    %s18 = scalar_lea.sflag [#allocation6], 1
    %19 = vsyncpa %s18, 0
    %20 = vsyncpa [#allocation4], 0
    %s21 = scalar_lea.sflag [#allocation4], 1
    %22 = vsyncpa %s21, 0
    loop: start=0, step=1, limit=4
    $region2: #{tpu_custom_call.1} parent=1 // loop_pre_header
      _
    $region3: #{tpu_custom_call.1} parent=1 // loop_header
      %s24 = sphi 0, %s28
      %p25 = scmp.ge.s32.totalorder %s24, 4
      %s34 = sphi 0, %s36
      %s37 = sphi 0, %s34
      %s38 = sphi 0, %s37
      %s54 = sphi 0, %s38
      %s60 = sphi 0, %s62
      %s63 = sphi 0, %s60
      %s64 = sphi 0, %s63
      %s80 = sphi 0, %s64
      %s84 = sphi 0, %s84
      %s86 = sphi 0, %s84
      %s87 = sphi 0, %s86
      %s101 = sphi 0, %s87
      %s105 = sphi 0, %s105
      %s107 = sphi 0, %s105
      %s108 = sphi 0, %s107
      %s122 = sphi 0, %s108
      %s126 = sphi 0, %s126
      %s128 = sphi 0, %s126
      %s129 = sphi 0, %s128
      %s143 = sphi 0, %s129
      %s149 = sphi 0, %s151
      %s152 = sphi 0, %s149
      %s153 = sphi 0, %s152
      %s169 = sphi 0, %s153
      %s175 = sphi 0, %s177
      %s178 = sphi 0, %s175
      %s179 = sphi 0, %s178
      %s195 = sphi 0, %s179
      %s201 = sphi 0, %s203
      %s204 = sphi 0, %s201
      %s205 = sphi 0, %s204
      %s221 = sphi 0, %s205
      %s227 = sphi 0, %s229
      %s230 = sphi 0, %s227
      %s231 = sphi 0, %s230
      %s247 = sphi 0, %s231
      %s253 = sphi 0, %s255
      %s256 = sphi 0, %s253
      %s257 = sphi 0, %s256
      %s273 = sphi 0, %s257
    $region4: #{tpu_custom_call.1} parent=1 // loop_header_branch
      %27 = sbr.rel (%p25) target = $region8
    $region5: #{tpu_custom_call.1} parent=1 // loop_body
      %s29 = ssub.s32 %s24, 1
      %s30 = ssub.s32 %s24, 2
      %s31 = sadd.s32 %s24, 1
      %s32 = ssub.s32 %s24, %s31
      %p33 = scmp.eq.s32.totalorder %s32, 0
      %s35 = sadd.s32 %s34, 1
      %s36 = scalar_select %p33, %s34, %s35
      %p39 = pneg %p33
      %p40 = scmp.eq.s32.totalorder %s24, 1
      %p41 = por %p39, %p40
      %p42 = scmp.ne.s32.totalorder %s34, %s37
      %p43 = scmp.eq.s32.totalorder %s24, 0
      %p44 = por %p42, %p43
      %p45 = scmp.ne.s32.totalorder %s34, %s37
      %p46 = scmp.eq.s32.totalorder %s29, 1
      %p47 = por %p45, %p46
      %p48 = scmp.ne.s32.totalorder %s37, %s38
      %p49 = scmp.eq.s32.totalorder %s29, 0
      %p50 = por %p48, %p49
      %p51 = scmp.ne.s32.totalorder %s37, %s38
      %p52 = scmp.eq.s32.totalorder %s30, 1
      %p53 = por %p51, %p52
      %p55 = scmp.ne.s32.totalorder %s38, %s54
      %p56 = scmp.eq.s32.totalorder %s30, 0
      %p57 = por %p55, %p56
      %s58 = ssub.s32 %s24, %s31
      %p59 = scmp.eq.s32.totalorder %s58, 0
      %s61 = sadd.s32 %s60, 1
      %s62 = scalar_select %p59, %s60, %s61
      %p65 = pneg %p59
      %p66 = scmp.eq.s32.totalorder %s24, 1
      %p67 = por %p65, %p66
      %p68 = scmp.ne.s32.totalorder %s60, %s63
      %p69 = scmp.eq.s32.totalorder %s24, 0
      %p70 = por %p68, %p69
      %p71 = scmp.ne.s32.totalorder %s60, %s63
      %p72 = scmp.eq.s32.totalorder %s29, 1
      %p73 = por %p71, %p72
      %p74 = scmp.ne.s32.totalorder %s63, %s64
      %p75 = scmp.eq.s32.totalorder %s29, 0
      %p76 = por %p74, %p75
      %p77 = scmp.ne.s32.totalorder %s63, %s64
      %p78 = scmp.eq.s32.totalorder %s30, 1
      %p79 = por %p77, %p78
      %p81 = scmp.ne.s32.totalorder %s64, %s80
      %p82 = scmp.eq.s32.totalorder %s30, 0
      %p83 = por %p81, %p82
      %s85 = sadd.s32 %s84, 1
      %p88 = scmp.eq.s32.totalorder %s24, 1
      %p89 = scmp.ne.s32.totalorder %s84, %s86
      %p90 = scmp.eq.s32.totalorder %s24, 0
      %p91 = por %p89, %p90
      %p92 = scmp.ne.s32.totalorder %s84, %s86
      %p93 = scmp.eq.s32.totalorder %s29, 1
      %p94 = por %p92, %p93
      %p95 = scmp.ne.s32.totalorder %s86, %s87
      %p96 = scmp.eq.s32.totalorder %s29, 0
      %p97 = por %p95, %p96
      %p98 = scmp.ne.s32.totalorder %s86, %s87
      %p99 = scmp.eq.s32.totalorder %s30, 1
      %p100 = por %p98, %p99
      %p102 = scmp.ne.s32.totalorder %s87, %s101
      %p103 = scmp.eq.s32.totalorder %s30, 0
      %p104 = por %p102, %p103
      %s106 = sadd.s32 %s105, 1
      %p109 = scmp.eq.s32.totalorder %s24, 1
      %p110 = scmp.ne.s32.totalorder %s105, %s107
      %p111 = scmp.eq.s32.totalorder %s24, 0
      %p112 = por %p110, %p111
      %p113 = scmp.ne.s32.totalorder %s105, %s107
      %p114 = scmp.eq.s32.totalorder %s29, 1
      %p115 = por %p113, %p114
      %p116 = scmp.ne.s32.totalorder %s107, %s108
      %p117 = scmp.eq.s32.totalorder %s29, 0
      %p118 = por %p116, %p117
      %p119 = scmp.ne.s32.totalorder %s107, %s108
      %p120 = scmp.eq.s32.totalorder %s30, 1
      %p121 = por %p119, %p120
      %p123 = scmp.ne.s32.totalorder %s108, %s122
      %p124 = scmp.eq.s32.totalorder %s30, 0
      %p125 = por %p123, %p124
      %s127 = sadd.s32 %s126, 1
      %p130 = scmp.eq.s32.totalorder %s24, 1
      %p131 = scmp.ne.s32.totalorder %s126, %s128
      %p132 = scmp.eq.s32.totalorder %s24, 0
      %p133 = por %p131, %p132
      %p134 = scmp.ne.s32.totalorder %s126, %s128
      %p135 = scmp.eq.s32.totalorder %s29, 1
      %p136 = por %p134, %p135
      %p137 = scmp.ne.s32.totalorder %s128, %s129
      %p138 = scmp.eq.s32.totalorder %s29, 0
      %p139 = por %p137, %p138
      %p140 = scmp.ne.s32.totalorder %s128, %s129
      %p141 = scmp.eq.s32.totalorder %s30, 1
      %p142 = por %p140, %p141
      %p144 = scmp.ne.s32.totalorder %s129, %s143
      %p145 = scmp.eq.s32.totalorder %s30, 0
      %p146 = por %p144, %p145
      %s147 = ssub.s32 %s24, %s31
      %p148 = scmp.eq.s32.totalorder %s147, 0
      %s150 = sadd.s32 %s149, 1
      %s151 = scalar_select %p148, %s149, %s150
      %p154 = pneg %p148
      %p155 = scmp.eq.s32.totalorder %s24, 1
      %p156 = por %p154, %p155
      %p157 = scmp.ne.s32.totalorder %s149, %s152
      %p158 = scmp.eq.s32.totalorder %s24, 0
      %p159 = por %p157, %p158
      %p160 = scmp.ne.s32.totalorder %s149, %s152
      %p161 = scmp.eq.s32.totalorder %s29, 1
      %p162 = por %p160, %p161
      %p163 = scmp.ne.s32.totalorder %s152, %s153
      %p164 = scmp.eq.s32.totalorder %s29, 0
      %p165 = por %p163, %p164
      %p166 = scmp.ne.s32.totalorder %s152, %s153
      %p167 = scmp.eq.s32.totalorder %s30, 1
      %p168 = por %p166, %p167
      %p170 = scmp.ne.s32.totalorder %s153, %s169
      %p171 = scmp.eq.s32.totalorder %s30, 0
      %p172 = por %p170, %p171
      %s173 = ssub.s32 %s24, %s31
      %p174 = scmp.eq.s32.totalorder %s173, 0
      %s176 = sadd.s32 %s175, 1
      %s177 = scalar_select %p174, %s175, %s176
      %p180 = pneg %p174
      %p181 = scmp.eq.s32.totalorder %s24, 1
      %p182 = por %p180, %p181
      %p183 = scmp.ne.s32.totalorder %s175, %s178
      %p184 = scmp.eq.s32.totalorder %s24, 0
      %p185 = por %p183, %p184
      %p186 = scmp.ne.s32.totalorder %s175, %s178
      %p187 = scmp.eq.s32.totalorder %s29, 1
      %p188 = por %p186, %p187
      %p189 = scmp.ne.s32.totalorder %s178, %s179
      %p190 = scmp.eq.s32.totalorder %s29, 0
      %p191 = por %p189, %p190
      %p192 = scmp.ne.s32.totalorder %s178, %s179
      %p193 = scmp.eq.s32.totalorder %s30, 1
      %p194 = por %p192, %p193
      %p196 = scmp.ne.s32.totalorder %s179, %s195
      %p197 = scmp.eq.s32.totalorder %s30, 0
      %p198 = por %p196, %p197
      %s199 = ssub.s32 %s24, %s31
      %p200 = scmp.eq.s32.totalorder %s199, 0
      %s202 = sadd.s32 %s201, 1
      %s203 = scalar_select %p200, %s201, %s202
      %p206 = pneg %p200
      %p207 = scmp.eq.s32.totalorder %s24, 1
      %p208 = por %p206, %p207
      %p209 = scmp.ne.s32.totalorder %s201, %s204
      %p210 = scmp.eq.s32.totalorder %s24, 0
      %p211 = por %p209, %p210
      %p212 = scmp.ne.s32.totalorder %s201, %s204
      %p213 = scmp.eq.s32.totalorder %s29, 1
      %p214 = por %p212, %p213
      %p215 = scmp.ne.s32.totalorder %s204, %s205
      %p216 = scmp.eq.s32.totalorder %s29, 0
      %p217 = por %p215, %p216
      %p218 = scmp.ne.s32.totalorder %s204, %s205
      %p219 = scmp.eq.s32.totalorder %s30, 1
      %p220 = por %p218, %p219
      %p222 = scmp.ne.s32.totalorder %s205, %s221
      %p223 = scmp.eq.s32.totalorder %s30, 0
      %p224 = por %p222, %p223
      %s225 = ssub.s32 %s24, %s31
      %p226 = scmp.eq.s32.totalorder %s225, 0
      %s228 = sadd.s32 %s227, 1
      %s229 = scalar_select %p226, %s227, %s228
      %p232 = pneg %p226
      %p233 = scmp.eq.s32.totalorder %s24, 1
      %p234 = por %p232, %p233
      %p235 = scmp.ne.s32.totalorder %s227, %s230
      %p236 = scmp.eq.s32.totalorder %s24, 0
      %p237 = por %p235, %p236
      %p238 = scmp.ne.s32.totalorder %s227, %s230
      %p239 = scmp.eq.s32.totalorder %s29, 1
      %p240 = por %p238, %p239
      %p241 = scmp.ne.s32.totalorder %s230, %s231
      %p242 = scmp.eq.s32.totalorder %s29, 0
      %p243 = por %p241, %p242
      %p244 = scmp.ne.s32.totalorder %s230, %s231
      %p245 = scmp.eq.s32.totalorder %s30, 1
      %p246 = por %p244, %p245
      %p248 = scmp.ne.s32.totalorder %s231, %s247
      %p249 = scmp.eq.s32.totalorder %s30, 0
      %p250 = por %p248, %p249
      %s251 = ssub.s32 %s24, %s31
      %p252 = scmp.eq.s32.totalorder %s251, 0
      %s254 = sadd.s32 %s253, 1
      %s255 = scalar_select %p252, %s253, %s254
      %p258 = pneg %p252
      %p259 = scmp.eq.s32.totalorder %s24, 1
      %p260 = por %p258, %p259
      %p261 = scmp.ne.s32.totalorder %s253, %s256
      %p262 = scmp.eq.s32.totalorder %s24, 0
      %p263 = por %p261, %p262
      %p264 = scmp.ne.s32.totalorder %s253, %s256
      %p265 = scmp.eq.s32.totalorder %s29, 1
      %p266 = por %p264, %p265
      %p267 = scmp.ne.s32.totalorder %s256, %s257
      %p268 = scmp.eq.s32.totalorder %s29, 0
      %p269 = por %p267, %p268
      %p270 = scmp.ne.s32.totalorder %s256, %s257
      %p271 = scmp.eq.s32.totalorder %s30, 1
      %p272 = por %p270, %p271
      %p274 = scmp.ne.s32.totalorder %s257, %s273
      %p275 = scmp.eq.s32.totalorder %s30, 0
      %p276 = por %p274, %p275
      %p277 = scmp.le.s32.totalorder 1, %s24
      %p278 = scmp.lt.s32.totalorder %s24, 3
      %p279 = pnand %p277, %p278
      %p280 = pneg %p279
      // Predicated region
      $region9: #{tpu_custom_call.1} parent=5 // pred_check
        _
      $region10: #{tpu_custom_call.1} parent=5 // pred_check_branch
        %282 = sbr.rel (%p279) target = $region12
      $region11: #{tpu_custom_call.1} parent=5 // pred_region
        %s283 = ssub.s32 %s24, 1
        // Predicated region
        $region13: #{tpu_custom_call.1} parent=11 // pred_check
          %p284 = pneg %p97
        $region14: #{tpu_custom_call.1} parent=11 // pred_check_branch
          %286 = sbr.rel (%p284) target = $region16
        $region15: #{tpu_custom_call.1} parent=11 // pred_region
          _
        $region16: #{tpu_custom_call.1} parent=11 // pred_fallthru
          _
        // Predicated region
        $region17: #{tpu_custom_call.1} parent=11 // pred_check
          %p287 = pneg %p118
        $region18: #{tpu_custom_call.1} parent=11 // pred_check_branch
          %289 = sbr.rel (%p287) target = $region20
        $region19: #{tpu_custom_call.1} parent=11 // pred_region
          _
        $region20: #{tpu_custom_call.1} parent=11 // pred_fallthru
          _
        // Predicated region
        $region21: #{tpu_custom_call.1} parent=11 // pred_check
          %p290 = pneg %p139
        $region22: #{tpu_custom_call.1} parent=11 // pred_check_branch
          %292 = sbr.rel (%p290) target = $region24
        $region23: #{tpu_custom_call.1} parent=11 // pred_region
          _
        $region24: #{tpu_custom_call.1} parent=11 // pred_fallthru
          _
      $region12: #{tpu_custom_call.1} parent=5 // pred_fallthru
        _
      %p293 = scmp.lt.s32.totalorder %s24, 2
      // Predicated region
      $region25: #{tpu_custom_call.1} parent=5 // pred_check
        %p294 = pneg %p293
      $region26: #{tpu_custom_call.1} parent=5 // pred_check_branch
        %296 = sbr.rel (%p294) target = $region28
      $region27: #{tpu_custom_call.1} parent=5 // pred_region
        // Predicated region
        $region29: #{tpu_custom_call.1} parent=27 // pred_check
          %p297 = pneg %p44
        $region30: #{tpu_custom_call.1} parent=27 // pred_check_branch
          %299 = sbr.rel (%p297) target = $region32
        $region31: #{tpu_custom_call.1} parent=27 // pred_region
          %s300 = sand.u32 %s34, 1
          %s301 = scalar_lea.sflag [#allocation3], %s300
          %s302 = sand.u32 %s34, 1
          %s303 = smul.addr %s302, 8
          %s304 = scalar_lea.vmem [#allocation2], %s303
          %s306 = ssub.s32 128, 128
          %307 = vsyncadd %s301, %s306
          %s308 = smul.addr %s24, 2
          %s309 = smul.addr %s308, 64
          %s310 = scalar_lea.hbm %s0, %s309
          %s311 = sshll.u32 %s304, 4
          %s312 = int_to_ptr.vmem [resolvable:$true] %s311
          %317 = dma.hbm_to_vmem [thread:$0]  %s310, 128, %s312, %s301, 64, 64, 4
        $region32: #{tpu_custom_call.1} parent=27 // pred_fallthru
          _
        // Predicated region
        $region33: #{tpu_custom_call.1} parent=27 // pred_check
          %p318 = pneg %p70
        $region34: #{tpu_custom_call.1} parent=27 // pred_check_branch
          %320 = sbr.rel (%p318) target = $region36
        $region35: #{tpu_custom_call.1} parent=27 // pred_region
          %s321 = sand.u32 %s24, 1
          %s322 = scalar_lea.sflag [#allocation6], %s321
          %s323 = sand.u32 %s60, 1
          %s324 = smul.addr %s323, 8
          %s325 = scalar_lea.vmem [#allocation5], %s324
          %s327 = ssub.s32 128, 128
          %328 = vsyncadd %s322, %s327
          %s329 = smul.addr %s24, 2
          %s330 = smul.addr %s329, 64
          %s331 = scalar_lea.hbm %s1, %s330
          %s332 = sshll.u32 %s325, 4
          %s333 = int_to_ptr.vmem [resolvable:$true] %s332
          %338 = dma.hbm_to_vmem [thread:$0]  %s331, 128, %s333, %s322, 64, 64, 4
        $region36: #{tpu_custom_call.1} parent=27 // pred_fallthru
          _
        // Predicated region
        $region37: #{tpu_custom_call.1} parent=27 // pred_check
          %p339 = pneg %p159
        $region38: #{tpu_custom_call.1} parent=27 // pred_check_branch
          %341 = sbr.rel (%p339) target = $region40
        $region39: #{tpu_custom_call.1} parent=27 // pred_region
          %p342 = scmp.lt.s32.totalorder %s24, 1
          %s343 = scalar_select %p342, %s24, 1
          %s344 = scalar_lea.vmem %s5, %s343
        $region40: #{tpu_custom_call.1} parent=27 // pred_fallthru
          _
        // Predicated region
        $region41: #{tpu_custom_call.1} parent=27 // pred_check
          %p345 = pneg %p185
        $region42: #{tpu_custom_call.1} parent=27 // pred_check_branch
          %347 = sbr.rel (%p345) target = $region44
        $region43: #{tpu_custom_call.1} parent=27 // pred_region
          %p348 = scmp.lt.s32.totalorder %s24, 1
          %s349 = scalar_select %p348, %s24, 1
          %s350 = scalar_lea.vmem %s6, %s349
        $region44: #{tpu_custom_call.1} parent=27 // pred_fallthru
          _
        // Predicated region
        $region45: #{tpu_custom_call.1} parent=27 // pred_check
          %p351 = pneg %p211
        $region46: #{tpu_custom_call.1} parent=27 // pred_check_branch
          %353 = sbr.rel (%p351) target = $region48
        $region47: #{tpu_custom_call.1} parent=27 // pred_region
          %s354 = sand.u32 %s24, 1
          %s355 = scalar_lea.sflag [#allocation6], %s354
          %s356 = sand.u32 %s201, 1
          %s357 = smul.addr %s356, 16
          %s358 = scalar_lea.vmem [#allocation7], %s357
          %s360 = ssub.s32 256, 256
          %361 = vsyncadd %s355, %s360
          %s362 = smul.addr %s24, 4
          %s363 = smul.addr %s362, 64
          %s364 = scalar_lea.hbm %s7, %s363
          %s365 = sshll.u32 %s358, 4
          %s366 = int_to_ptr.vmem [resolvable:$true] %s365
          %371 = dma.hbm_to_vmem [thread:$0]  %s364, 256, %s366, %s355, 64, 64, 4
        $region48: #{tpu_custom_call.1} parent=27 // pred_fallthru
          _
        // Predicated region
        $region49: #{tpu_custom_call.1} parent=27 // pred_check
          %p372 = pneg %p237
        $region50: #{tpu_custom_call.1} parent=27 // pred_check_branch
          %374 = sbr.rel (%p372) target = $region52
        $region51: #{tpu_custom_call.1} parent=27 // pred_region
          %p375 = scmp.lt.s32.totalorder %s24, 1
          %s376 = scalar_select %p375, %s24, 1
          %s377 = scalar_lea.vmem %s8, %s376
        $region52: #{tpu_custom_call.1} parent=27 // pred_fallthru
          _
      $region28: #{tpu_custom_call.1} parent=5 // pred_fallthru
        _
      %p378 = scmp.le.s32.totalorder 1, %s24
      %p379 = scmp.lt.s32.totalorder %s24, 3
      %p380 = pnand %p378, %p379
      %p381 = pneg %p380
      // Predicated region
      $region53: #{tpu_custom_call.1} parent=5 // pred_check
        _
      $region54: #{tpu_custom_call.1} parent=5 // pred_check_branch
        %383 = sbr.rel (%p380) target = $region56
      $region55: #{tpu_custom_call.1} parent=5 // pred_region
        %s384 = ssub.s32 %s24, 1
        %s385 = sand.u32 %s37, 1
        %s386 = scalar_lea.sflag [#allocation3], %s385
        %s387 = sand.u32 %s37, 1
        %s388 = smul.addr %s387, 8
        %s389 = scalar_lea.vmem [#allocation2], %s388
        // Predicated region
        $region57: #{tpu_custom_call.1} parent=55 // pred_check
          %p390 = pneg %p50
        $region58: #{tpu_custom_call.1} parent=55 // pred_check_branch
          %392 = sbr.rel (%p390) target = $region60
        $region59: #{tpu_custom_call.1} parent=55 // pred_region
          %393 = dma.done %s386, 128
        $region60: #{tpu_custom_call.1} parent=55 // pred_fallthru
          _
        %s394 = sand.u32 %s29, 1
        %s395 = scalar_lea.sflag [#allocation6], %s394
        %s396 = sand.u32 %s63, 1
        %s397 = smul.addr %s396, 8
        %s398 = scalar_lea.vmem [#allocation5], %s397
        // Predicated region
        $region61: #{tpu_custom_call.1} parent=55 // pred_check
          %p399 = pneg %p76
        $region62: #{tpu_custom_call.1} parent=55 // pred_check_branch
          %401 = sbr.rel (%p399) target = $region64
        $region63: #{tpu_custom_call.1} parent=55 // pred_region
          %402 = dma.done %s395, 128
        $region64: #{tpu_custom_call.1} parent=55 // pred_fallthru
          _
        %s403 = sand.u32 %s29, 1
        %s404 = scalar_lea.sflag [#allocation6], %s403
        %s405 = sand.u32 %s204, 1
        %s406 = smul.addr %s405, 16
        %s407 = scalar_lea.vmem [#allocation7], %s406
        // Predicated region
        $region65: #{tpu_custom_call.1} parent=55 // pred_check
          %p408 = pneg %p217
        $region66: #{tpu_custom_call.1} parent=55 // pred_check_branch
          %410 = sbr.rel (%p408) target = $region68
        $region67: #{tpu_custom_call.1} parent=55 // pred_region
          %411 = dma.done %s404, 256
        $region68: #{tpu_custom_call.1} parent=55 // pred_fallthru
          _
        %s412 = sand.u32 %s37, 1
        %s413 = scalar_lea.sflag [#allocation3], %s412
        %s414 = sand.u32 %s37, 1
        %s415 = smul.addr %s414, 8
        %s416 = scalar_lea.vmem [#allocation2], %s415
        %p417 = pneg %p50
        %p418 = pneg %p47
        %s419 = sand.u32 %s29, 1
        %s420 = scalar_lea.sflag [#allocation6], %s419
        %s421 = sand.u32 %s63, 1
        %s422 = smul.addr %s421, 8
        %s423 = scalar_lea.vmem [#allocation5], %s422
        %p424 = pneg %p76
        %p425 = pneg %p73
        %p426 = pneg %p97
        %p427 = pneg %p94
        %p428 = pneg %p118
        %p429 = pneg %p115
        %p430 = pneg %p139
        %p431 = pneg %p136
        %p432 = scmp.lt.s32.totalorder %s29, 1
        %s433 = scalar_select %p432, %s29, 1
        %s434 = scalar_lea.vmem %s5, %s433
        %p435 = pneg %p165
        %p436 = pneg %p162
        %p437 = scmp.lt.s32.totalorder %s29, 1
        %s438 = scalar_select %p437, %s29, 1
        %s439 = scalar_lea.vmem %s6, %s438
        %p440 = pneg %p191
        %p441 = pneg %p188
        %s442 = sand.u32 %s29, 1
        %s443 = scalar_lea.sflag [#allocation6], %s442
        %s444 = sand.u32 %s204, 1
        %s445 = smul.addr %s444, 16
        %s446 = scalar_lea.vmem [#allocation7], %s445
        %p447 = pneg %p217
        %p448 = pneg %p214
        %p449 = scmp.lt.s32.totalorder %s29, 1
        %s450 = scalar_select %p449, %s29, 1
        %s451 = scalar_lea.vmem %s8, %s450
        %p452 = pneg %p243
        %p453 = pneg %p240
        %p454 = pneg %p269
        %p455 = pneg %p266
        %s456 = sand.u32 %s256, 1
        %s457 = scalar_lea.sflag [#allocation4], %s456
        %s458 = sand.u32 %s256, 1
        %s459 = smul.addr %s458, 2
        %s460 = scalar_lea.vmem [#allocation8], %s459
        %p461 = scmp.lt.s32.totalorder %s29, 1
        %s462 = scalar_select %p461, %s29, 1
        %s463 = scalar_lea.vmem %s5, %s462
        %p464 = scmp.lt.s32.totalorder %s29, 1
        %s465 = scalar_select %p464, %s29, 1
        %s466 = scalar_lea.vmem %s6, %s465
        %p467 = scmp.lt.s32.totalorder %s29, 1
        %s468 = scalar_select %p467, %s29, 1
        %s469 = scalar_lea.vmem %s8, %s468
        %v471 = vld [vmem:[%s389] sm:$0xf]
        %v472 = vld [vmem:[%s389 + $0x4] sm:$0xf]
        %v473 = vld [vmem:[%s398] sm:$0xf]
        %v474 = vld [vmem:[%s398 + $0x4] sm:$0xf]
        %v475 = vld [vmem:[%s2] sm:$0xf]
        %v476 = vld [vmem:[%s2 + $0x4] sm:$0xf]
        %v477 = vld [vmem:[%s3] sm:$0x1]
        %v478 = vld [vmem:[%s4] sm:$0x1]
        %v479 = vld [vmem:[%s463] sm:$0x1]
        %v480 = vld [vmem:[%s466] sm:$0x1]
        %v482 = vlaneseq
        %v483 = vshrl.u32 %v482, 7
        %v484 = vsub.s32 0, %v483
        %v485 = vrot.slane %v480, %v484
        %v489 = vunpack.c.l.b16 %v471
        %v490 = vunpack.c.l.b16 %v472
        %v491 = vpack.c.b16 %v490, %v489
        %v494 = vunpack.c.l.b16 %v473
        %v495 = vunpack.c.l.b16 %v474
        %v496 = vpack.c.b16 %v495, %v494
        %vm498 = vcmask 130048
        %v500 = vsel %vm498, %v491, 0
        %502 = vmatprep.subr.bf16.mxu0 0
        %503 = vmatpush1.bf16.msra.mxu0 0
        %504 = vmatprep.subr.bf16.mxu0 0
        %505 = vmatpush1.bf16.msra.mxu0 0
        %506 = vmatprep.subr.bf16.mxu0 0
        %507 = vmatpush1.bf16.msra.mxu0 0
        %508 = vmatprep.subr.bf16.mxu0 0
        %509 = vmatpush1.bf16.msra.mxu0 0
        %510 = vmatprep.subr.bf16.mxu0 0
        %511 = vmatpush1.bf16.msra.mxu0 0
        %512 = vmatprep.subr.bf16.mxu0 0
        %513 = vmatpush1.bf16.msra.mxu0 0
        %514 = vmatprep.subr.bf16.mxu0 0
        %515 = vmatpush1.bf16.msra.mxu0 0
        %516 = vmatprep.subr.bf16.mxu0 0
        %517 = vmatpush1.bf16.msra.mxu0 %v496
        %518 = vmatprep.subr.bf16.mxu0 0
        %519 = vmatpush2.bf16.msra.mxu0 0
        %520 = vmatprep.subr.bf16.mxu0 0
        %521 = vmatpush2.bf16.msra.mxu0 0
        %522 = vmatprep.subr.bf16.mxu0 0
        %523 = vmatpush2.bf16.msra.mxu0 0
        %524 = vmatprep.subr.bf16.mxu0 0
        %525 = vmatpush2.bf16.msra.mxu0 0
        %526 = vmatprep.subr.bf16.mxu0 0
        %527 = vmatpush2.bf16.msra.mxu0 0
        %528 = vmatprep.subr.bf16.mxu0 0
        %529 = vmatpush2.bf16.msra.mxu0 0
        %530 = vmatprep.subr.bf16.mxu0 0
        %531 = vmatpush2.bf16.msra.mxu0 0
        %532 = vmatprep.subr.bf16.mxu0 0
        %533 = vmatpush2.bf16.msra.mxu0 0
        %534 = vmatprep.mubr.bf16.mxu0 0
        %535 = vmatmul.mubr.bf16.gmra.mxu0 %v500
        %v536 = vpop.f32.mrf.mxu0
        %v537 = vadd.f32 %v485, %v536
        %v538 = vpop.f32.mrf.mxu0
        %v539 = vpop.f32.mrf.mxu0
        %v540 = vadd.f32 %v485, %v539
        %v541 = vpop.f32.mrf.mxu0
        %542 = vdwg.mxu0
        %v543 = vmax.f32 %v537, 0.0
        %v544 = vmax.f32 %v540, 0.0
        %v545 = vpack.c.bf16 %v544, %v543
        %v546 = vld [vmem:[%s407] sm:$0xf]
        %v547 = vld [vmem:[%s407 + $0x4] sm:$0xf]
        %v548 = vld [vmem:[%s407 + $0x8] sm:$0xf]
        %v549 = vld [vmem:[%s407 + $0xc] sm:$0xf]
        %v552 = vunpack.c.l.b16 %v475
        %v553 = vunpack.c.l.b16 %v476
        %v554 = vpack.c.b16 %v553, %v552
        %vm555 = vcmask 15360
        %v557 = vsel %vm555, %v554, 0
        %vm559 = vcmask 1040384
        %v561 = vsel %vm559, %v479, 0
        %563 = vmatprep.subr.bf16.mxu0 0
        %564 = vmatpush1.bf16.msra.mxu0 0
        %565 = vmatprep.subr.bf16.mxu0 0
        %566 = vmatpush1.bf16.msra.mxu0 0
        %567 = vmatprep.subr.bf16.mxu0 0
        %568 = vmatpush1.bf16.msra.mxu0 0
        %569 = vmatprep.subr.bf16.mxu0 0
        %570 = vmatpush1.bf16.msra.mxu0 0
        %571 = vmatprep.subr.bf16.mxu0 0
        %572 = vmatpush1.bf16.msra.mxu0 0
        %573 = vmatprep.subr.bf16.mxu0 0
        %574 = vmatpush1.bf16.msra.mxu0 0
        %575 = vmatprep.subr.bf16.mxu0 0
        %576 = vmatpush1.bf16.msra.mxu0 0
        %577 = vmatprep.subr.bf16.mxu0 0
        %578 = vmatpush1.bf16.msra.mxu0 %v561
        %579 = vmatprep.subr.bf16.mxu0 0
        %580 = vmatpush2.bf16.msra.mxu0 0
        %581 = vmatprep.subr.bf16.mxu0 0
        %582 = vmatpush2.bf16.msra.mxu0 0
        %583 = vmatprep.subr.bf16.mxu0 0
        %584 = vmatpush2.bf16.msra.mxu0 0
        %585 = vmatprep.subr.bf16.mxu0 0
        %586 = vmatpush2.bf16.msra.mxu0 0
        %587 = vmatprep.subr.bf16.mxu0 0
        %588 = vmatpush2.bf16.msra.mxu0 0
        %589 = vmatprep.subr.bf16.mxu0 0
        %590 = vmatpush2.bf16.msra.mxu0 0
        %591 = vmatprep.subr.bf16.mxu0 0
        %592 = vmatpush2.bf16.msra.mxu0 0
        %593 = vmatprep.subr.bf16.mxu0 0
        %594 = vmatpush2.bf16.msra.mxu0 0
        %595 = vmatprep.mubr.bf16.mxu0 0
        %596 = vmatmul.mubr.bf16.gmra.mxu0 %v557
        %v597 = vpop.f32.mrf.mxu0
        %v598 = vadd.f32 0.0, %v597
        %v599 = vpop.f32.mrf.mxu0
        %v600 = vpop.f32.mrf.mxu0
        %v601 = vadd.f32 0.0, %v600
        %v602 = vpop.f32.mrf.mxu0
        %603 = vdwg.mxu0
        %v608 = vunpack.c.l.b16 %v546
        %v609 = vunpack.c.l.b16 %v547
        %v610 = vunpack.c.l.b16 %v548
        %v611 = vunpack.c.l.b16 %v549
        %v612 = vpack.c.b16 %v609, %v608
        %v613 = vpack.c.b16 %v611, %v610
        %vm616 = vcmask 261120
        %v618 = vsel %vm616, %v545, 0
        %620 = vmatprep.subr.bf16.mxu0 0
        %621 = vmatpush1.bf16.msra.mxu0 0
        %622 = vmatprep.subr.bf16.mxu0 0
        %623 = vmatpush1.bf16.msra.mxu0 0
        %624 = vmatprep.subr.bf16.mxu0 0
        %625 = vmatpush1.bf16.msra.mxu0 0
        %626 = vmatprep.subr.bf16.mxu0 0
        %627 = vmatpush1.bf16.msra.mxu0 0
        %628 = vmatprep.subr.bf16.mxu0 0
        %629 = vmatpush1.bf16.msra.mxu0 0
        %630 = vmatprep.subr.bf16.mxu0 0
        %631 = vmatpush1.bf16.msra.mxu0 0
        %632 = vmatprep.subr.bf16.mxu0 0
        %633 = vmatpush1.bf16.msra.mxu0 %v613
        %634 = vmatprep.subr.bf16.mxu0 0
        %635 = vmatpush1.bf16.msra.mxu0 %v612
        %636 = vmatprep.subr.bf16.mxu0 0
        %637 = vmatpush2.bf16.msra.mxu0 0
        %638 = vmatprep.subr.bf16.mxu0 0
        %639 = vmatpush2.bf16.msra.mxu0 0
        %640 = vmatprep.subr.bf16.mxu0 0
        %641 = vmatpush2.bf16.msra.mxu0 0
        %642 = vmatprep.subr.bf16.mxu0 0
        %643 = vmatpush2.bf16.msra.mxu0 0
        %644 = vmatprep.subr.bf16.mxu0 0
        %645 = vmatpush2.bf16.msra.mxu0 0
        %646 = vmatprep.subr.bf16.mxu0 0
        %647 = vmatpush2.bf16.msra.mxu0 0
        %648 = vmatprep.subr.bf16.mxu0 0
        %649 = vmatpush2.bf16.msra.mxu0 0
        %650 = vmatprep.subr.bf16.mxu0 0
        %651 = vmatpush2.bf16.msra.mxu0 0
        %652 = vmatprep.mubr.bf16.mxu0 0
        %653 = vmatmul.mubr.bf16.gmra.mxu0 %v618
        %v654 = vpop.f32.mrf.mxu0
        %v655 = vadd.f32 %v598, %v654
        %v656 = vpop.f32.mrf.mxu0
        %v657 = vpop.f32.mrf.mxu0
        %v658 = vadd.f32 %v601, %v657
        %v659 = vpop.f32.mrf.mxu0
        %660 = vdwg.mxu0
        %v661 = vpack.c.bf16 %v658, %v655
        %v662 = vld [vmem:[%s469] sm:$0x1]
        %v664 = vlaneseq
        %v665 = vshrl.u32 %v664, 7
        %v666 = vsub.s32 0, %v665
        %v667 = vrot.slane %v662, %v666
        %669 = vmatprep.subr.bf16.mxu0 0
        %670 = vmatpush1.bf16.msra.mxu0 0
        %671 = vmatprep.subr.bf16.mxu0 0
        %672 = vmatpush1.bf16.msra.mxu0 0
        %673 = vmatprep.subr.bf16.mxu0 0
        %674 = vmatpush1.bf16.msra.mxu0 0
        %675 = vmatprep.subr.bf16.mxu0 0
        %676 = vmatpush1.bf16.msra.mxu0 0
        %677 = vmatprep.subr.bf16.mxu0 0
        %678 = vmatpush1.bf16.msra.mxu0 0
        %679 = vmatprep.subr.bf16.mxu0 0
        %680 = vmatpush1.bf16.msra.mxu0 0
        %681 = vmatprep.subr.bf16.mxu0 0
        %682 = vmatpush1.bf16.msra.mxu0 0
        %683 = vmatprep.subr.bf16.mxu0 0
        %684 = vmatpush1.bf16.msra.mxu0 %v661
        %685 = vmatprep.subr.bf16.mxu0 0
        %686 = vmatpush2.bf16.msra.mxu0 0
        %687 = vmatprep.subr.bf16.mxu0 0
        %688 = vmatpush2.bf16.msra.mxu0 0
        %689 = vmatprep.subr.bf16.mxu0 0
        %690 = vmatpush2.bf16.msra.mxu0 0
        %691 = vmatprep.subr.bf16.mxu0 0
        %692 = vmatpush2.bf16.msra.mxu0 0
        %693 = vmatprep.subr.bf16.mxu0 0
        %694 = vmatpush2.bf16.msra.mxu0 0
        %695 = vmatprep.subr.bf16.mxu0 0
        %696 = vmatpush2.bf16.msra.mxu0 0
        %697 = vmatprep.subr.bf16.mxu0 0
        %698 = vmatpush2.bf16.msra.mxu0 0
        %699 = vmatprep.subr.bf16.mxu0 0
        %700 = vmatpush2.bf16.msra.mxu0 0
        %701 = vmatprep.mubr.bf16.mxu0 0
        %702 = vmatmul.mubr.bf16.gmra.mxu0 %v500
        %v703 = vpop.f32.mrf.mxu0
        %v704 = vadd.f32 %v667, %v703
        %v705 = vpop.f32.mrf.mxu0
        %v706 = vpop.f32.mrf.mxu0
        %v707 = vadd.f32 %v667, %v706
        %v708 = vpop.f32.mrf.mxu0
        %709 = vdwg.mxu0
        %v710 = vmax.f32 %v704, 0.0
        %v711 = vmax.f32 %v707, 0.0
        %v712 = vpack.c.bf16 %v711, %v710
        %v714 = vsel %vm498, %v477, 0
        %716 = vmatprep.subr.bf16.mxu0 0
        %717 = vmatpush1.bf16.msra.mxu0 0
        %718 = vmatprep.subr.bf16.mxu0 0
        %719 = vmatpush1.bf16.msra.mxu0 0
        %720 = vmatprep.subr.bf16.mxu0 0
        %721 = vmatpush1.bf16.msra.mxu0 0
        %722 = vmatprep.subr.bf16.mxu0 0
        %723 = vmatpush1.bf16.msra.mxu0 0
        %724 = vmatprep.subr.bf16.mxu0 0
        %725 = vmatpush1.bf16.msra.mxu0 0
        %726 = vmatprep.subr.bf16.mxu0 0
        %727 = vmatpush1.bf16.msra.mxu0 0
        %728 = vmatprep.subr.bf16.mxu0 0
        %729 = vmatpush1.bf16.msra.mxu0 0
        %730 = vmatprep.subr.bf16.mxu0 0
        %731 = vmatpush1.bf16.msra.mxu0 %v712
        %732 = vmatprep.subr.bf16.mxu0 0
        %733 = vmatpush2.bf16.msra.mxu0 0
        %734 = vmatprep.subr.bf16.mxu0 0
        %735 = vmatpush2.bf16.msra.mxu0 0
        %736 = vmatprep.subr.bf16.mxu0 0
        %737 = vmatpush2.bf16.msra.mxu0 0
        %738 = vmatprep.subr.bf16.mxu0 0
        %739 = vmatpush2.bf16.msra.mxu0 0
        %740 = vmatprep.subr.bf16.mxu0 0
        %741 = vmatpush2.bf16.msra.mxu0 0
        %742 = vmatprep.subr.bf16.mxu0 0
        %743 = vmatpush2.bf16.msra.mxu0 0
        %744 = vmatprep.subr.bf16.mxu0 0
        %745 = vmatpush2.bf16.msra.mxu0 0
        %746 = vmatprep.subr.bf16.mxu0 0
        %747 = vmatpush2.bf16.msra.mxu0 0
        %748 = vmatprep.mubr.bf16.mxu0 0
        %749 = vmatmul.mubr.bf16.gmra.mxu0 %v714
        %v750 = vpop.f32.mrf.mxu0
        %v751 = vadd.f32 0.0, %v750
        %v752 = vpop.f32.mrf.mxu0
        %v753 = vpop.f32.mrf.mxu0
        %v754 = vpop.f32.mrf.mxu0
        %755 = vdwg.mxu0
        %v756 = vpack.c.bf16 %v540, %v537
        %v758 = vsel %vm498, %v478, 0
        %760 = vmatprep.subr.bf16.mxu0 0
        %761 = vmatpush1.bf16.msra.mxu0 0
        %762 = vmatprep.subr.bf16.mxu0 0
        %763 = vmatpush1.bf16.msra.mxu0 0
        %764 = vmatprep.subr.bf16.mxu0 0
        %765 = vmatpush1.bf16.msra.mxu0 0
        %766 = vmatprep.subr.bf16.mxu0 0
        %767 = vmatpush1.bf16.msra.mxu0 0
        %768 = vmatprep.subr.bf16.mxu0 0
        %769 = vmatpush1.bf16.msra.mxu0 0
        %770 = vmatprep.subr.bf16.mxu0 0
        %771 = vmatpush1.bf16.msra.mxu0 0
        %772 = vmatprep.subr.bf16.mxu0 0
        %773 = vmatpush1.bf16.msra.mxu0 0
        %774 = vmatprep.subr.bf16.mxu0 0
        %775 = vmatpush1.bf16.msra.mxu0 %v756
        %776 = vmatprep.subr.bf16.mxu0 0
        %777 = vmatpush2.bf16.msra.mxu0 0
        %778 = vmatprep.subr.bf16.mxu0 0
        %779 = vmatpush2.bf16.msra.mxu0 0
        %780 = vmatprep.subr.bf16.mxu0 0
        %781 = vmatpush2.bf16.msra.mxu0 0
        %782 = vmatprep.subr.bf16.mxu0 0
        %783 = vmatpush2.bf16.msra.mxu0 0
        %784 = vmatprep.subr.bf16.mxu0 0
        %785 = vmatpush2.bf16.msra.mxu0 0
        %786 = vmatprep.subr.bf16.mxu0 0
        %787 = vmatpush2.bf16.msra.mxu0 0
        %788 = vmatprep.subr.bf16.mxu0 0
        %789 = vmatpush2.bf16.msra.mxu0 0
        %790 = vmatprep.subr.bf16.mxu0 0
        %791 = vmatpush2.bf16.msra.mxu0 0
        %792 = vmatprep.mubr.bf16.mxu0 0
        %793 = vmatmul.mubr.bf16.gmra.mxu0 %v758
        %v794 = vpop.f32.mrf.mxu0
        %v795 = vadd.f32 0.0, %v794
        %v796 = vpop.f32.mrf.mxu0
        %v797 = vpop.f32.mrf.mxu0
        %v798 = vpop.f32.mrf.mxu0
        %799 = vdwg.mxu0
        %801 = vrot.lane.b32.xlu0 %v795, 32
        %v802 = vpop.permute.xlu0 %801
        %v804 = vsel %vm616, %v751, %v802
        %vm805 = vcmask 523264
        %v806 = vsel %vm805, %v804, 0.0
        %807 = vst [vmem:[%s460] sm:$0x3] %v806
        %s808 = sand.u32 %s256, 1
        %s809 = scalar_lea.sflag [#allocation4], %s808
        %s810 = sand.u32 %s256, 1
        %s811 = smul.addr %s810, 2
        %s812 = scalar_lea.vmem [#allocation8], %s811
        // Predicated region
        $region69: #{tpu_custom_call.1} parent=55 // pred_check
          %p813 = pneg %p266
        $region70: #{tpu_custom_call.1} parent=55 // pred_check_branch
          %815 = sbr.rel (%p813) target = $region72
        $region71: #{tpu_custom_call.1} parent=55 // pred_region
          %s817 = ssub.s32 32, 32
          %818 = vsyncadd %s809, %s817
          %s819 = smul.addr %s29, 32
          %s820 = scalar_lea.hbm %s9, %s819
          %s822 = sshll.u32 %s812, 4
          %s823 = int_to_ptr.vmem [resolvable:$true] %s822
          %825 = dma.vmem_to_hbm [thread:$0]  %s823, 32, %s820, %s809
        $region72: #{tpu_custom_call.1} parent=55 // pred_fallthru
          _
      $region56: #{tpu_custom_call.1} parent=5 // pred_fallthru
        _
      %p826 = scmp.le.s32.totalorder 2, %s24
      // Predicated region
      $region73: #{tpu_custom_call.1} parent=5 // pred_check
        %p827 = pneg %p826
      $region74: #{tpu_custom_call.1} parent=5 // pred_check_branch
        %829 = sbr.rel (%p827) target = $region76
      $region75: #{tpu_custom_call.1} parent=5 // pred_region
        %s830 = ssub.s32 %s24, 2
        // Predicated region
        $region77: #{tpu_custom_call.1} parent=75 // pred_check
          %p831 = pneg %p272
        $region78: #{tpu_custom_call.1} parent=75 // pred_check_branch
          %833 = sbr.rel (%p831) target = $region80
        $region79: #{tpu_custom_call.1} parent=75 // pred_region
          %s834 = sand.u32 %s257, 1
          %s835 = scalar_lea.sflag [#allocation4], %s834
          %s836 = sand.u32 %s257, 1
          %s837 = smul.addr %s836, 2
          %s838 = scalar_lea.vmem [#allocation8], %s837
          %839 = dma.done %s835, 32
        $region80: #{tpu_custom_call.1} parent=75 // pred_fallthru
          _
      $region76: #{tpu_custom_call.1} parent=5 // pred_fallthru
        _
    $region6: #{tpu_custom_call.1} parent=1 // loop_footer
      %s28 = sadd.s32 1, %s24
    $region7: #{tpu_custom_call.1} parent=1 // loop_footer_branch
      %23 = sbr.rel target = $region3
    $region8: #{tpu_custom_call.1} parent=1 // loop_exit
      _
    %840 = vsyncpa [#allocation3], 1
    %s841 = scalar_lea.sflag [#allocation3], 1
    %842 = vsyncpa %s841, 1
    %843 = vsyncpa [#allocation6], 1
    %s844 = scalar_lea.sflag [#allocation6], 1
    %845 = vsyncpa %s844, 1
    %846 = vsyncpa [#allocation4], 1
    %s847 = scalar_lea.sflag [#allocation4], 1
    %848 = vsyncpa %s847, 1

</llo_original>
